<compile_context>
chip_gen: v6e
topology: v6e:2x2x1
jax: 0.10.0
libtpu: 0.0.40
codegen_flags: <defaults>
</compile_context>

<pallas_src>
import functools

import jax
import jax.numpy as jnp
from jax.experimental import pallas as pl
from jax.experimental.pallas import tpu as pltpu

EPS = 1e-5
LANES = 128


def _round_up(n, m):
    return (n + m - 1) // m * m


def _pick_tc(T, tc_max):
    """Largest Tc <= tc_max that divides T (avoids padding the time axis)."""
    tc = max(1, min(T, tc_max))
    while T % tc:
        tc -= 1
    return tc


def _vmem_limit_bytes():
    """Generation-aware VMEM budget: leave >=16 MiB headroom below physical
    capacity (64 MiB/TC on v7x, 128 MiB on v5e/v6e), cap at 100 MiB."""
    cap = 64 * 1024 * 1024
    try:
        cap = int(pltpu.get_tpu_info().vmem_capacity_bytes)
    except Exception:
        pass
    return max(32 * 1024 * 1024,
               min(cap - 16 * 1024 * 1024, 100 * 1024 * 1024))


def _sigmoid(z):
    # sigmoid(z) == 0.5 * (1 + tanh(z/2)) -- a single EUP transcendental.
    return 0.5 * (jnp.tanh(0.5 * z) + 1.0)


def _bn_train(x, gamma, inv_b):
    """BatchNorm1d (training mode): biased batch stats over axis 0, beta == 0.
    Uses E[(x-mean)^2] rather than E[x^2]-mean^2 to avoid negative variance."""
    mean = jnp.sum(x, axis=0, keepdims=True) * inv_b
    d = x - mean
    var = jnp.sum(d * d, axis=0, keepdims=True) * inv_b
    return gamma * d * jax.lax.rsqrt(var + EPS)


# ----------------------------------------------------------------------------
# Sequential (recurrent) Pallas kernel: Tc timesteps per grid step.
# ----------------------------------------------------------------------------

def _bnlstm_seq_kernel(px_ref, h0_ref, c0_ref, whh_ref, ghh_ref, gc_ref,
                       hs_ref, cs_ref, h_scr, c_scr,
                       *, tc, hidden_pad, batch):
    @pl.when(pl.program_id(0) == 0)
    def _():
        h_scr[...] = h0_ref[...].astype(h_scr.dtype)   # bf16 h carry
        c_scr[...] = c0_ref[...]                       # f32 c carry

    inv_b = jnp.float32(1.0 / batch)
    whh = whh_ref[...]          # (Hp, 4Hp) bf16, VMEM-resident whole sequence
    ghh = ghh_ref[...]          # (1, 4Hp)  f32
    gc = gc_ref[...]            # (1, Hp)   f32
    Hp = hidden_pad

    def step(s, carry):
        h = h_scr[...]                                  # (B, Hp) bf16
        c = c_scr[...]                                  # (B, Hp) f32
        # Recurrent MXU matmul (bf16 operands, f32 accumulation).
        wh = jnp.dot(h, whh, preferred_element_type=jnp.float32)
        # bn_hh(wh) + [bn_ih(x W_ih) + bias] (pre-computed, streamed in bf16).
        pre = _bn_train(wh, ghh, inv_b) + px_ref[s].astype(jnp.float32)

        f = pre[:, 0 * Hp:1 * Hp]
        i = pre[:, 1 * Hp:2 * Hp]
        o = pre[:, 2 * Hp:3 * Hp]
        g = pre[:, 3 * Hp:4 * Hp]

        c1 = _sigmoid(f) * c + _sigmoid(i) * jnp.tanh(g)
        h1 = _sigmoid(o) * jnp.tanh(_bn_train(c1, gc, inv_b))

        h_scr[...] = h1.astype(h_scr.dtype)
        c_scr[...] = c1
        hs_ref[s] = h1.astype(hs_ref.dtype)
        cs_ref[s] = c1.astype(cs_ref.dtype)
        return carry

    jax.lax.fori_loop(0, tc, step, 0, unroll=True)


# ----------------------------------------------------------------------------
# Wrappers.
# ----------------------------------------------------------------------------

def _pad_gate_cols(a, H, Hp):
    """(R, 4H) -> (R, 4Hp): each gate block zero-padded from H to Hp columns."""
    out = jnp.zeros((a.shape[0], 4 * Hp), a.dtype)
    for k in range(4):
        out = out.at[:, k * Hp:k * Hp + H].set(a[:, k * H:(k + 1) * H])
    return out


def _input_projection(xs, w_ih_bf16, gamma_ih, bias):
    """Hoisted non-recurrent path: bn_ih(x_t @ W_ih) + bias for ALL timesteps.

    One (T*B, K) x (K, 4Hp) matmul (MXU-friendly M = T*B) plus per-timestep
    batch statistics over the batch axis.  Returned in bf16 for streaming.
    """
    T, B, K = xs.shape
    wi = jnp.dot(xs.reshape(T * B, K).astype(jnp.bfloat16), w_ih_bf16,
                 preferred_element_type=jnp.float32).reshape(T, B, -1)
    mean = jnp.mean(wi, axis=1, keepdims=True)           # per-timestep batch mean
    d = wi - mean
    var = jnp.mean(d * d, axis=1, keepdims=True)         # biased variance
    return (gamma_ih * d * jax.lax.rsqrt(var + EPS) + bias).astype(jnp.bfloat16)


def bnlstm_sequence(xs, h0, c0, w_ih, w_hh, bias, gamma_ih, gamma_hh, gamma_c,
                    *, tc_max=8, out_dtype=jnp.bfloat16, unpad=True):
    """Run T BNLSTMCell steps (recurrence inside a single pallas_call).

    xs: (T, B, input_size); h0, c0: (B, H).
    Returns (hs, cs), each (T, B, H) (or (T, B, Hp) if unpad=False): the
    per-step (h_1, c_1).  BN statistics are over the full batch; the batch dim
    is never grid-tiled or sharded.
    """
    T, B, K = xs.shape
    H = h0.shape[1]
    Hp = _round_up(H, LANES)
    Tc = _pick_tc(T, tc_max)

    pad_h = lambda a: jnp.pad(a, ((0, 0), (0, Hp - H)))

    wih_p = _pad_gate_cols(w_ih, H, Hp).astype(jnp.bfloat16)              # (K,4Hp)
    whh_p = _pad_gate_cols(jnp.pad(w_hh, ((0, Hp - H), (0, 0))), H, Hp
                           ).astype(jnp.bfloat16)                         # (Hp,4Hp)
    bias_p = _pad_gate_cols(bias, H, Hp)                                  # (1,4Hp)
    gih_p = _pad_gate_cols(gamma_ih, H, Hp)
    ghh_p = _pad_gate_cols(gamma_hh, H, Hp)
    gc_p = pad_h(gamma_c)                                                 # (1,Hp)
    h0_p = pad_h(h0)
    c0_p = pad_h(c0)

    # Non-recurrent input projection + its BN + bias, hoisted out of the loop.
    px = _input_projection(xs, wih_p, gih_p, bias_p)                      # (T,B,4Hp) bf16

    def build(const_kwargs):
        def const(shape):
            return pl.BlockSpec(shape, lambda t: (0,) * len(shape), **const_kwargs)

        grid_spec = pltpu.PrefetchScalarGridSpec(
            num_scalar_prefetch=0,
            grid=(T // Tc,),
            in_specs=[
                # Streamed per grid step (Tc timesteps of precomputed pre-acts).
                # NOTE: if the per-block DMA is still exposed at tiny B/H,
                # pipeline_mode=pl.Buffered(3) here is a cheap knob (mind v7x VMEM).
                pl.BlockSpec((Tc, B, 4 * Hp), lambda t: (t, 0, 0)),
                const((B, Hp)),          # h0 (read only at t == 0)
                const((B, Hp)),          # c0
                const((Hp, 4 * Hp)),     # W_hh (bf16, DMA'd once, VMEM-resident)
                const((1, 4 * Hp)),      # gamma_hh
                const((1, Hp)),          # gamma_c
            ],
            out_specs=(
                pl.BlockSpec((Tc, B, Hp), lambda t: (t, 0, 0)),  # h_t stream
                pl.BlockSpec((Tc, B, Hp), lambda t: (t, 0, 0)),  # c_t stream
            ),
            scratch_shapes=[pltpu.VMEM((B, Hp), jnp.bfloat16),   # h carry (MXU LHS)
                            pltpu.VMEM((B, Hp), jnp.float32)],   # c carry
        )

        out_bytes = 2 * T * B * Hp * jnp.dtype(out_dtype).itemsize
        cost = pl.CostEstimate(
            flops=2 * T * B * 4 * Hp * Hp,
            transcendentals=T * (5 * B * Hp + 5 * Hp),
            bytes_accessed=(int(px.size) * 2 + int(whh_p.size) * 2
                            + (int(h0_p.size) + int(c0_p.size)
                               + int(ghh_p.size) + int(gc_p.size)) * 4
                            + out_bytes),
        )

        kernel = functools.partial(_bnlstm_seq_kernel,
                                   tc=Tc, hidden_pad=Hp, batch=B)
        return pl.pallas_call(
            kernel,
            out_shape=(jax.ShapeDtypeStruct((T, B, Hp), out_dtype),
                       jax.ShapeDtypeStruct((T, B, Hp), out_dtype)),
            grid_spec=grid_spec,
            compiler_params=pltpu.CompilerParams(
                dimension_semantics=("arbitrary",),    # sequential state carry
                vmem_limit_bytes=_vmem_limit_bytes()),
            cost_estimate=cost,
        )

    args = (px, h0_p, c0_p, whh_p, ghh_p, gc_p)
    try:
        # Single-buffer the constant operands (no duplicate VMEM copy).
        hs, cs = build(dict(pipeline_mode=pl.Buffered(1)))(*args)
    except Exception:
        # TODO(synk): pipeline_mode=pl.Buffered(1) not supported by this jax
        # build -> fall back to default (double-buffered) constant inputs.
        hs, cs = build({})(*args)

    if unpad and Hp != H:
        hs, cs = hs[:, :, :H], cs[:, :, :H]
    return hs, cs


def bnlstm_cell(x, h0, c0, *params):
    """Single BNLSTMCell.forward step (T == 1 sequence)."""
    hs, cs = bnlstm_sequence(x[None], h0, c0, *params)
    return hs[0], cs[0]


# ----------------------------------------------------------------------------
# Parameter init mirroring BNLSTMCell.reset_parameters(), and pure-JAX refs.
# ----------------------------------------------------------------------------

def make_params(input_size, hidden_size, forget_bias=1.0, seed=0):
    key = jax.random.PRNGKey(seed)
    # weight_ih: orthogonal init, shape (input_size, 4*hidden_size).
    a = jax.random.normal(key, (4 * hidden_size, input_size), dtype=jnp.float32)
    q, _ = jnp.linalg.qr(a)                     # orthonormal columns
    w_ih = q.T.astype(jnp.float32)              # (input_size, 4H)
    # weight_hh: eye(H) repeated 4 times along dim=1 -> (H, 4H).
    w_hh = jnp.tile(jnp.eye(hidden_size, dtype=jnp.float32), (1, 4))
    # bias: zeros; forget-gate block (first H entries) = forget_bias.
    bias = jnp.zeros((4 * hidden_size,), jnp.float32)
    bias = bias.at[:hidden_size].set(forget_bias).reshape(1, 4 * hidden_size)
    # BatchNorm affine: gamma = 0.1, beta = 0 (beta omitted since 0).
    gamma_ih = jnp.full((1, 4 * hidden_size), 0.1, jnp.float32)
    gamma_hh = jnp.full((1, 4 * hidden_size), 0.1, jnp.float32)
    gamma_c = jnp.full((1, hidden_size), 0.1, jnp.float32)
    return w_ih, w_hh, bias, gamma_ih, gamma_hh, gamma_c


def _bn_ref(x, gamma):
    mean = jnp.mean(x, axis=0, keepdims=True)
    var = jnp.mean((x - mean) ** 2, axis=0, keepdims=True)
    return gamma * (x - mean) * jax.lax.rsqrt(var + EPS)


def reference_step(x, h0, c0, w_ih, w_hh, bias, g_ih, g_hh, g_c):
    wi = x @ w_ih
    wh = h0 @ w_hh
    pre = _bn_ref(wh, g_hh) + _bn_ref(wi, g_ih) + bias
    H = h0.shape[1]
    f, i, o, g = pre[:, :H], pre[:, H:2 * H], pre[:, 2 * H:3 * H], pre[:, 3 * H:]
    c1 = jax.nn.sigmoid(f) * c0 + jax.nn.sigmoid(i) * jnp.tanh(g)
    h1 = jax.nn.sigmoid(o) * jnp.tanh(_bn_ref(c1, g_c))
    return h1, c1


def reference_sequence(xs, h0, c0, *params):
    hs, cs = [], []
    h, c = h0, c0
    for t in range(xs.shape[0]):
        h, c = reference_step(xs[t], h, c, *params)
        hs.append(h)
        cs.append(c)
    return jnp.stack(hs), jnp.stack(cs)


if __name__ == "__main__":
    batch, input_size, hidden_size, seq_len = 8, 16, 32, 16

    key = jax.random.PRNGKey(0)
    kx, kh, kc = jax.random.split(key, 3)
    xs = jax.random.normal(kx, (seq_len, batch, input_size), dtype=jnp.float32)
    h0 = jax.random.normal(kh, (batch, hidden_size), dtype=jnp.float32)
    c0 = jax.random.normal(kc, (batch, hidden_size), dtype=jnp.float32)

    params = make_params(input_size, hidden_size, forget_bias=1.0, seed=0)

    # Single cell step (matches BNLSTMCell.forward).
    h1, c1 = bnlstm_cell(xs[0], h0, c0, *params)
    # Full sequence: hoisted input projection + blocked recurrent pallas_call.
    hs, cs = bnlstm_sequence(xs, h0, c0, *params)
    jax.block_until_ready((h1, c1, hs, cs))

    h1_ref, c1_ref = reference_step(xs[0], h0, c0, *params)
    hs_ref, cs_ref = reference_sequence(xs, h0, c0, *params)

    # bf16 MXU operands, bf16 streamed pre-activations and bf16 outputs =>
    # slightly looser tolerance vs. the f32 reference.
    tol = 3e-2
    assert jnp.allclose(h1.astype(jnp.float32), h1_ref, atol=tol, rtol=tol)
    assert jnp.allclose(c1.astype(jnp.float32), c1_ref, atol=tol, rtol=tol)
    assert jnp.allclose(hs.astype(jnp.float32), hs_ref, atol=tol, rtol=tol)
    assert jnp.allclose(cs.astype(jnp.float32), cs_ref, atol=tol, rtol=tol)

    print("KERNEL_OK")
</pallas_src>

<mosaic_0001>
module attributes {stable_mosaic.version = 11 : i64} {
  func.func @_bnlstm_seq_kernel(%arg0: i32, %arg1: memref<1x8x512xbf16, #tpu.memory_space<vmem>>, %arg2: memref<8x128xf32, #tpu.memory_space<vmem>>, %arg3: memref<8x128xf32, #tpu.memory_space<vmem>>, %arg4: memref<128x512xbf16, #tpu.memory_space<vmem>>, %arg5: memref<1x512xf32, #tpu.memory_space<vmem>>, %arg6: memref<1x128xf32, #tpu.memory_space<vmem>>, %arg7: memref<1x8x128xbf16, #tpu.memory_space<vmem>>, %arg8: memref<1x8x128xbf16, #tpu.memory_space<vmem>>, %arg9: memref<8x128xbf16, #tpu.memory_space<vmem>>, %arg10: memref<8x128xf32, #tpu.memory_space<vmem>>) attributes {dimension_semantics = [#tpu.dimension_semantics<arbitrary>], iteration_bounds = array<i64: 1>, scalar_prefetch = 0 : i64, scratch_operands = 2 : i64, tpu.core_type = #tpu.core_type<tc>, window_params = [{transform_indices = @transform_0, window_bounds = array<i64: 1, 8, 512>}, {pipeline_mode = #tpu.pipeline_mode<synchronous>, transform_indices = @transform_1, window_bounds = array<i64: 8, 128>}, {pipeline_mode = #tpu.pipeline_mode<synchronous>, transform_indices = @transform_2, window_bounds = array<i64: 8, 128>}, {pipeline_mode = #tpu.pipeline_mode<synchronous>, transform_indices = @transform_3, window_bounds = array<i64: 128, 512>}, {pipeline_mode = #tpu.pipeline_mode<synchronous>, transform_indices = @transform_4, window_bounds = array<i64: 1, 512>}, {pipeline_mode = #tpu.pipeline_mode<synchronous>, transform_indices = @transform_5, window_bounds = array<i64: 1, 128>}, {transform_indices = @transform_6, window_bounds = array<i64: 1, 8, 128>}, {transform_indices = @transform_7, window_bounds = array<i64: 1, 8, 128>}]} {
    %c0_i32 = arith.constant 0 : i32
    %0 = arith.cmpi eq, %arg0, %c0_i32 : i32
    %1 = arith.extui %0 : i1 to i32
    %c0_i32_0 = arith.constant 0 : i32
    %2 = arith.cmpi ne, %1, %c0_i32_0 : i32
    scf.if %2 {
      %c0_37 = arith.constant 0 : index
      %c0_38 = arith.constant 0 : index
      %94 = vector.load %arg2[%c0_37, %c0_38] : memref<8x128xf32, #tpu.memory_space<vmem>>, vector<8x128xf32>
      %95 = arith.truncf %94 : vector<8x128xf32> to vector<8x128xbf16>
      %c0_39 = arith.constant 0 : index
      %c0_40 = arith.constant 0 : index
      %96 = vector.load %arg9[%c0_39, %c0_40] : memref<8x128xbf16, #tpu.memory_space<vmem>>, vector<8x128xbf16>
      tpu.vector_store %arg9[%c0_39, %c0_40], %95 {strides = array<i32>} : memref<8x128xbf16, #tpu.memory_space<vmem>>, vector<8x128xbf16>,
      %c0_41 = arith.constant 0 : index
      %c0_42 = arith.constant 0 : index
      %97 = vector.load %arg3[%c0_41, %c0_42] : memref<8x128xf32, #tpu.memory_space<vmem>>, vector<8x128xf32>
      %c0_43 = arith.constant 0 : index
      %c0_44 = arith.constant 0 : index
      %98 = vector.load %arg10[%c0_43, %c0_44] : memref<8x128xf32, #tpu.memory_space<vmem>>, vector<8x128xf32>
      tpu.vector_store %arg10[%c0_43, %c0_44], %97 {strides = array<i32>} : memref<8x128xf32, #tpu.memory_space<vmem>>, vector<8x128xf32>,
    } else {
    }
    %c0 = arith.constant 0 : index
    %c0_1 = arith.constant 0 : index
    %3 = vector.load %arg4[%c0, %c0_1] : memref<128x512xbf16, #tpu.memory_space<vmem>>, vector<128x512xbf16>
    %c0_2 = arith.constant 0 : index
    %c0_3 = arith.constant 0 : index
    %4 = vector.load %arg5[%c0_2, %c0_3] : memref<1x512xf32, #tpu.memory_space<vmem>>, vector<1x512xf32>
    %c0_4 = arith.constant 0 : index
    %c0_5 = arith.constant 0 : index
    %5 = vector.load %arg6[%c0_4, %c0_5] : memref<1x128xf32, #tpu.memory_space<vmem>>, vector<1x128xf32>
    %cst = arith.constant 1.250000e-01 : f32
    %c0_i32_6 = arith.constant 0 : i32
    %c0_7 = arith.constant 0 : index
    %c0_8 = arith.constant 0 : index
    %6 = vector.load %arg9[%c0_7, %c0_8] : memref<8x128xbf16, #tpu.memory_space<vmem>>, vector<8x128xbf16>
    %c0_9 = arith.constant 0 : index
    %c0_10 = arith.constant 0 : index
    %7 = vector.load %arg10[%c0_9, %c0_10] : memref<8x128xf32, #tpu.memory_space<vmem>>, vector<8x128xf32>
    %cst_11 = arith.constant dense<0.000000e+00> : vector<8x512xf32>
    %8 = tpu.matmul %6, %3, %cst_11 {dimension_numbers = #tpu.dot_dimension_numbers<[1], [0], [0], [1], [0, 0, 1, 1], [], []>} : vector<8x128xbf16>, vector<128x512xbf16>, vector<8x512xf32> -> vector<8x512xf32>
    %cst_12 = arith.constant dense<0.000000e+00> : vector<512xf32>
    %9 = vector.multi_reduction <add>, %8, %cst_12 [0] : vector<8x512xf32> to vector<512xf32>
    %10 = vector.shape_cast %9 : vector<512xf32> to vector<1x512xf32>
    %11 = vector.broadcast %cst : f32 to vector<1x512xf32>
    %12 = arith.mulf %10, %11 : vector<1x512xf32>
    %13 = vector.broadcast %12 : vector<1x512xf32> to vector<8x512xf32>
    %14 = arith.subf %8, %13 : vector<8x512xf32>
    %15 = arith.mulf %14, %14 : vector<8x512xf32>
    %cst_13 = arith.constant dense<0.000000e+00> : vector<512xf32>
    %16 = vector.multi_reduction <add>, %15, %cst_13 [0] : vector<8x512xf32> to vector<512xf32>
    %17 = vector.shape_cast %16 : vector<512xf32> to vector<1x512xf32>
    %18 = vector.broadcast %cst : f32 to vector<1x512xf32>
    %19 = arith.mulf %17, %18 : vector<1x512xf32>
    %20 = vector.broadcast %4 : vector<1x512xf32> to vector<8x512xf32>
    %21 = arith.mulf %20, %14 : vector<8x512xf32>
    %cst_14 = arith.constant 9.99999974E-6 : f32
    %22 = vector.broadcast %cst_14 : f32 to vector<1x512xf32>
    %23 = arith.addf %19, %22 : vector<1x512xf32>
    %24 = math.rsqrt %23 : vector<1x512xf32>
    %25 = vector.broadcast %24 : vector<1x512xf32> to vector<8x512xf32>
    %26 = arith.mulf %21, %25 : vector<8x512xf32>
    %27 = arith.index_cast %c0_i32_6 : i32 to index
    %c0_15 = arith.constant 0 : index
    %c0_16 = arith.constant 0 : index
    %28 = vector.load %arg1[%27, %c0_15, %c0_16] : memref<1x8x512xbf16, #tpu.memory_space<vmem>>, vector<1x8x512xbf16>
    %29 = vector.shape_cast %28 : vector<1x8x512xbf16> to vector<8x512xbf16>
    %30 = arith.extf %29 : vector<8x512xbf16> to vector<8x512xf32>
    %31 = arith.addf %26, %30 : vector<8x512xf32>
    %32 = vector.extract_strided_slice %31 {offsets = [0, 0], sizes = [8, 128], strides = [1, 1]} : vector<8x512xf32> to vector<8x128xf32>
    %33 = vector.extract_strided_slice %31 {offsets = [0, 128], sizes = [8, 128], strides = [1, 1]} : vector<8x512xf32> to vector<8x128xf32>
    %34 = vector.extract_strided_slice %31 {offsets = [0, 256], sizes = [8, 128], strides = [1, 1]} : vector<8x512xf32> to vector<8x128xf32>
    %35 = vector.extract_strided_slice %31 {offsets = [0, 384], sizes = [8, 128], strides = [1, 1]} : vector<8x512xf32> to vector<8x128xf32>
    %cst_17 = arith.constant 5.000000e-01 : f32
    %36 = vector.broadcast %cst_17 : f32 to vector<8x128xf32>
    %37 = arith.mulf %36, %32 : vector<8x128xf32>
    %38 = math.tanh %37 : vector<8x128xf32>
    %cst_18 = arith.constant 1.000000e+00 : f32
    %39 = vector.broadcast %cst_18 : f32 to vector<8x128xf32>
    %40 = arith.addf %38, %39 : vector<8x128xf32>
    %cst_19 = arith.constant 5.000000e-01 : f32
    %41 = vector.broadcast %cst_19 : f32 to vector<8x128xf32>
    %42 = arith.mulf %41, %40 : vector<8x128xf32>
    %43 = arith.mulf %42, %7 : vector<8x128xf32>
    %cst_20 = arith.constant 5.000000e-01 : f32
    %44 = vector.broadcast %cst_20 : f32 to vector<8x128xf32>
    %45 = arith.mulf %44, %33 : vector<8x128xf32>
    %46 = math.tanh %45 : vector<8x128xf32>
    %cst_21 = arith.constant 1.000000e+00 : f32
    %47 = vector.broadcast %cst_21 : f32 to vector<8x128xf32>
    %48 = arith.addf %46, %47 : vector<8x128xf32>
    %cst_22 = arith.constant 5.000000e-01 : f32
    %49 = vector.broadcast %cst_22 : f32 to vector<8x128xf32>
    %50 = arith.mulf %49, %48 : vector<8x128xf32>
    %51 = math.tanh %35 : vector<8x128xf32>
    %52 = arith.mulf %50, %51 : vector<8x128xf32>
    %53 = arith.addf %43, %52 : vector<8x128xf32>
    %cst_23 = arith.constant 5.000000e-01 : f32
    %54 = vector.broadcast %cst_23 : f32 to vector<8x128xf32>
    %55 = arith.mulf %54, %34 : vector<8x128xf32>
    %56 = math.tanh %55 : vector<8x128xf32>
    %cst_24 = arith.constant 1.000000e+00 : f32
    %57 = vector.broadcast %cst_24 : f32 to vector<8x128xf32>
    %58 = arith.addf %56, %57 : vector<8x128xf32>
    %cst_25 = arith.constant 5.000000e-01 : f32
    %59 = vector.broadcast %cst_25 : f32 to vector<8x128xf32>
    %60 = arith.mulf %59, %58 : vector<8x128xf32>
    %cst_26 = arith.constant dense<0.000000e+00> : vector<128xf32>
    %61 = vector.multi_reduction <add>, %53, %cst_26 [0] : vector<8x128xf32> to vector<128xf32>
    %62 = vector.shape_cast %61 : vector<128xf32> to vector<1x128xf32>
    %63 = vector.broadcast %cst : f32 to vector<1x128xf32>
    %64 = arith.mulf %62, %63 : vector<1x128xf32>
    %65 = vector.broadcast %64 : vector<1x128xf32> to vector<8x128xf32>
    %66 = arith.subf %53, %65 : vector<8x128xf32>
    %67 = arith.mulf %66, %66 : vector<8x128xf32>
    %cst_27 = arith.constant dense<0.000000e+00> : vector<128xf32>
    %68 = vector.multi_reduction <add>, %67, %cst_27 [0] : vector<8x128xf32> to vector<128xf32>
    %69 = vector.shape_cast %68 : vector<128xf32> to vector<1x128xf32>
    %70 = vector.broadcast %cst : f32 to vector<1x128xf32>
    %71 = arith.mulf %69, %70 : vector<1x128xf32>
    %72 = vector.broadcast %5 : vector<1x128xf32> to vector<8x128xf32>
    %73 = arith.mulf %72, %66 : vector<8x128xf32>
    %cst_28 = arith.constant 9.99999974E-6 : f32
    %74 = vector.broadcast %cst_28 : f32 to vector<1x128xf32>
    %75 = arith.addf %71, %74 : vector<1x128xf32>
    %76 = math.rsqrt %75 : vector<1x128xf32>
    %77 = vector.broadcast %76 : vector<1x128xf32> to vector<8x128xf32>
    %78 = arith.mulf %73, %77 : vector<8x128xf32>
    %79 = math.tanh %78 : vector<8x128xf32>
    %80 = arith.mulf %60, %79 : vector<8x128xf32>
    %81 = arith.truncf %80 : vector<8x128xf32> to vector<8x128xbf16>
    %c0_29 = arith.constant 0 : index
    %c0_30 = arith.constant 0 : index
    %82 = vector.load %arg9[%c0_29, %c0_30] : memref<8x128xbf16, #tpu.memory_space<vmem>>, vector<8x128xbf16>
    tpu.vector_store %arg9[%c0_29, %c0_30], %81 {strides = array<i32>} : memref<8x128xbf16, #tpu.memory_space<vmem>>, vector<8x128xbf16>,
    %c0_31 = arith.constant 0 : index
    %c0_32 = arith.constant 0 : index
    %83 = vector.load %arg10[%c0_31, %c0_32] : memref<8x128xf32, #tpu.memory_space<vmem>>, vector<8x128xf32>
    tpu.vector_store %arg10[%c0_31, %c0_32], %53 {strides = array<i32>} : memref<8x128xf32, #tpu.memory_space<vmem>>, vector<8x128xf32>,
    %84 = arith.truncf %80 : vector<8x128xf32> to vector<8x128xbf16>
    %85 = arith.index_cast %c0_i32_6 : i32 to index
    %c0_33 = arith.constant 0 : index
    %c0_34 = arith.constant 0 : index
    %86 = vector.load %arg7[%85, %c0_33, %c0_34] : memref<1x8x128xbf16, #tpu.memory_space<vmem>>, vector<1x8x128xbf16>
    %87 = vector.shape_cast %86 : vector<1x8x128xbf16> to vector<8x128xbf16>
    %88 = vector.shape_cast %84 : vector<8x128xbf16> to vector<1x8x128xbf16>
    tpu.vector_store %arg7[%85, %c0_33, %c0_34], %88 {strides = array<i32>} : memref<1x8x128xbf16, #tpu.memory_space<vmem>>, vector<1x8x128xbf16>,
    %89 = arith.truncf %53 : vector<8x128xf32> to vector<8x128xbf16>
    %90 = arith.index_cast %c0_i32_6 : i32 to index
    %c0_35 = arith.constant 0 : index
    %c0_36 = arith.constant 0 : index
    %91 = vector.load %arg8[%90, %c0_35, %c0_36] : memref<1x8x128xbf16, #tpu.memory_space<vmem>>, vector<1x8x128xbf16>
    %92 = vector.shape_cast %91 : vector<1x8x128xbf16> to vector<8x128xbf16>
    %93 = vector.shape_cast %89 : vector<8x128xbf16> to vector<1x8x128xbf16>
    tpu.vector_store %arg8[%90, %c0_35, %c0_36], %93 {strides = array<i32>} : memref<1x8x128xbf16, #tpu.memory_space<vmem>>, vector<1x8x128xbf16>,
    %c1_i32 = arith.constant 1 : i32
    return
  }
  func.func @transform_0(%arg0: i32) -> (i32, i32, i32) {
    %c0_i32 = arith.constant 0 : i32
    %c0_i32_0 = arith.constant 0 : i32
    %c0_i32_1 = arith.constant 0 : i32
    return %arg0, %c0_i32, %c0_i32_0 : i32, i32, i32
  }
  func.func @transform_1(%arg0: i32) -> (i32, i32) {
    %c0_i32 = arith.constant 0 : i32
    %c0_i32_0 = arith.constant 0 : i32
    %c0_i32_1 = arith.constant 0 : i32
    return %c0_i32, %c0_i32_0 : i32, i32
  }
  func.func @transform_2(%arg0: i32) -> (i32, i32) {
    %c0_i32 = arith.constant 0 : i32
    %c0_i32_0 = arith.constant 0 : i32
    %c0_i32_1 = arith.constant 0 : i32
    return %c0_i32, %c0_i32_0 : i32, i32
  }
  func.func @transform_3(%arg0: i32) -> (i32, i32) {
    %c0_i32 = arith.constant 0 : i32
    %c0_i32_0 = arith.constant 0 : i32
    %c0_i32_1 = arith.constant 0 : i32
    return %c0_i32, %c0_i32_0 : i32, i32
  }
  func.func @transform_4(%arg0: i32) -> (i32, i32) {
    %c0_i32 = arith.constant 0 : i32
    %c0_i32_0 = arith.constant 0 : i32
    %c0_i32_1 = arith.constant 0 : i32
    return %c0_i32, %c0_i32_0 : i32, i32
  }
  func.func @transform_5(%arg0: i32) -> (i32, i32) {
    %c0_i32 = arith.constant 0 : i32
    %c0_i32_0 = arith.constant 0 : i32
    %c0_i32_1 = arith.constant 0 : i32
    return %c0_i32, %c0_i32_0 : i32, i32
  }
  func.func @transform_6(%arg0: i32) -> (i32, i32, i32) {
    %c0_i32 = arith.constant 0 : i32
    %c0_i32_0 = arith.constant 0 : i32
    %c0_i32_1 = arith.constant 0 : i32
    return %arg0, %c0_i32, %c0_i32_0 : i32, i32, i32
  }
  func.func @transform_7(%arg0: i32) -> (i32, i32, i32) {
    %c0_i32 = arith.constant 0 : i32
    %c0_i32_0 = arith.constant 0 : i32
    %c0_i32_1 = arith.constant 0 : i32
    return %arg0, %c0_i32, %c0_i32_0 : i32, i32, i32
  }
}

module attributes {stable_mosaic.version = 11 : i64} {
  func.func @_bnlstm_seq_kernel(%arg0: i32, %arg1: memref<1x8x512xbf16, #tpu.memory_space<vmem>>, %arg2: memref<8x128xf32, #tpu.memory_space<vmem>>, %arg3: memref<8x128xf32, #tpu.memory_space<vmem>>, %arg4: memref<128x512xbf16, #tpu.memory_space<vmem>>, %arg5: memref<1x512xf32, #tpu.memory_space<vmem>>, %arg6: memref<1x128xf32, #tpu.memory_space<vmem>>, %arg7: memref<1x8x128xbf16, #tpu.memory_space<vmem>>, %arg8: memref<1x8x128xbf16, #tpu.memory_space<vmem>>, %arg9: memref<8x128xbf16, #tpu.memory_space<vmem>>, %arg10: memref<8x128xf32, #tpu.memory_space<vmem>>) attributes {dimension_semantics = [#tpu.dimension_semantics<arbitrary>], iteration_bounds = array<i64: 1>, scalar_prefetch = 0 : i64, scratch_operands = 2 : i64, tpu.core_type = #tpu.core_type<tc>, window_params = [{transform_indices = @transform_0, window_bounds = array<i64: 1, 8, 512>}, {pipeline_mode = #tpu.pipeline_mode<synchronous>, transform_indices = @transform_1, window_bounds = array<i64: 8, 128>}, {pipeline_mode = #tpu.pipeline_mode<synchronous>, transform_indices = @transform_2, window_bounds = array<i64: 8, 128>}, {pipeline_mode = #tpu.pipeline_mode<synchronous>, transform_indices = @transform_3, window_bounds = array<i64: 128, 512>}, {pipeline_mode = #tpu.pipeline_mode<synchronous>, transform_indices = @transform_4, window_bounds = array<i64: 1, 512>}, {pipeline_mode = #tpu.pipeline_mode<synchronous>, transform_indices = @transform_5, window_bounds = array<i64: 1, 128>}, {transform_indices = @transform_6, window_bounds = array<i64: 1, 8, 128>}, {transform_indices = @transform_7, window_bounds = array<i64: 1, 8, 128>}]} {
    %c0_i32 = arith.constant 0 : i32
    %0 = arith.cmpi eq, %arg0, %c0_i32 : i32
    %1 = arith.extui %0 : i1 to i32
    %c0_i32_0 = arith.constant 0 : i32
    %2 = arith.cmpi ne, %1, %c0_i32_0 : i32
    scf.if %2 {
      %c0_37 = arith.constant 0 : index
      %c0_38 = arith.constant 0 : index
      %94 = vector.load %arg2[%c0_37, %c0_38] : memref<8x128xf32, #tpu.memory_space<vmem>>, vector<8x128xf32>
      %95 = arith.truncf %94 : vector<8x128xf32> to vector<8x128xbf16>
      %c0_39 = arith.constant 0 : index
      %c0_40 = arith.constant 0 : index
      %96 = vector.load %arg9[%c0_39, %c0_40] : memref<8x128xbf16, #tpu.memory_space<vmem>>, vector<8x128xbf16>
      tpu.vector_store %arg9[%c0_39, %c0_40], %95 {strides = array<i32>} : memref<8x128xbf16, #tpu.memory_space<vmem>>, vector<8x128xbf16>,
      %c0_41 = arith.constant 0 : index
      %c0_42 = arith.constant 0 : index
      %97 = vector.load %arg3[%c0_41, %c0_42] : memref<8x128xf32, #tpu.memory_space<vmem>>, vector<8x128xf32>
      %c0_43 = arith.constant 0 : index
      %c0_44 = arith.constant 0 : index
      %98 = vector.load %arg10[%c0_43, %c0_44] : memref<8x128xf32, #tpu.memory_space<vmem>>, vector<8x128xf32>
      tpu.vector_store %arg10[%c0_43, %c0_44], %97 {strides = array<i32>} : memref<8x128xf32, #tpu.memory_space<vmem>>, vector<8x128xf32>,
    } else {
    }
    %c0 = arith.constant 0 : index
    %c0_1 = arith.constant 0 : index
    %3 = vector.load %arg4[%c0, %c0_1] : memref<128x512xbf16, #tpu.memory_space<vmem>>, vector<128x512xbf16>
    %c0_2 = arith.constant 0 : index
    %c0_3 = arith.constant 0 : index
    %4 = vector.load %arg5[%c0_2, %c0_3] : memref<1x512xf32, #tpu.memory_space<vmem>>, vector<1x512xf32>
    %c0_4 = arith.constant 0 : index
    %c0_5 = arith.constant 0 : index
    %5 = vector.load %arg6[%c0_4, %c0_5] : memref<1x128xf32, #tpu.memory_space<vmem>>, vector<1x128xf32>
    %cst = arith.constant 1.250000e-01 : f32
    %c0_i32_6 = arith.constant 0 : i32
    %c0_7 = arith.constant 0 : index
    %c0_8 = arith.constant 0 : index
    %6 = vector.load %arg9[%c0_7, %c0_8] : memref<8x128xbf16, #tpu.memory_space<vmem>>, vector<8x128xbf16>
    %c0_9 = arith.constant 0 : index
    %c0_10 = arith.constant 0 : index
    %7 = vector.load %arg10[%c0_9, %c0_10] : memref<8x128xf32, #tpu.memory_space<vmem>>, vector<8x128xf32>
    %cst_11 = arith.constant dense<0.000000e+00> : vector<8x512xf32>
    %8 = tpu.matmul %6, %3, %cst_11 {dimension_numbers = #tpu.dot_dimension_numbers<[1], [0], [0], [1], [0, 0, 1, 1], [], []>} : vector<8x128xbf16>, vector<128x512xbf16>, vector<8x512xf32> -> vector<8x512xf32>
    %cst_12 = arith.constant dense<0.000000e+00> : vector<512xf32>
    %9 = vector.multi_reduction <add>, %8, %cst_12 [0] : vector<8x512xf32> to vector<512xf32>
    %10 = vector.shape_cast %9 : vector<512xf32> to vector<1x512xf32>
    %11 = vector.broadcast %cst : f32 to vector<1x512xf32>
    %12 = arith.mulf %10, %11 : vector<1x512xf32>
    %13 = vector.broadcast %12 : vector<1x512xf32> to vector<8x512xf32>
    %14 = arith.subf %8, %13 : vector<8x512xf32>
    %15 = arith.mulf %14, %14 : vector<8x512xf32>
    %cst_13 = arith.constant dense<0.000000e+00> : vector<512xf32>
    %16 = vector.multi_reduction <add>, %15, %cst_13 [0] : vector<8x512xf32> to vector<512xf32>
    %17 = vector.shape_cast %16 : vector<512xf32> to vector<1x512xf32>
    %18 = vector.broadcast %cst : f32 to vector<1x512xf32>
    %19 = arith.mulf %17, %18 : vector<1x512xf32>
    %20 = vector.broadcast %4 : vector<1x512xf32> to vector<8x512xf32>
    %21 = arith.mulf %20, %14 : vector<8x512xf32>
    %cst_14 = arith.constant 9.99999974E-6 : f32
    %22 = vector.broadcast %cst_14 : f32 to vector<1x512xf32>
    %23 = arith.addf %19, %22 : vector<1x512xf32>
    %24 = math.rsqrt %23 : vector<1x512xf32>
    %25 = vector.broadcast %24 : vector<1x512xf32> to vector<8x512xf32>
    %26 = arith.mulf %21, %25 : vector<8x512xf32>
    %27 = arith.index_cast %c0_i32_6 : i32 to index
    %c0_15 = arith.constant 0 : index
    %c0_16 = arith.constant 0 : index
    %28 = vector.load %arg1[%27, %c0_15, %c0_16] : memref<1x8x512xbf16, #tpu.memory_space<vmem>>, vector<1x8x512xbf16>
    %29 = vector.shape_cast %28 : vector<1x8x512xbf16> to vector<8x512xbf16>
    %30 = arith.extf %29 : vector<8x512xbf16> to vector<8x512xf32>
    %31 = arith.addf %26, %30 : vector<8x512xf32>
    %32 = vector.extract_strided_slice %31 {offsets = [0, 0], sizes = [8, 128], strides = [1, 1]} : vector<8x512xf32> to vector<8x128xf32>
    %33 = vector.extract_strided_slice %31 {offsets = [0, 128], sizes = [8, 128], strides = [1, 1]} : vector<8x512xf32> to vector<8x128xf32>
    %34 = vector.extract_strided_slice %31 {offsets = [0, 256], sizes = [8, 128], strides = [1, 1]} : vector<8x512xf32> to vector<8x128xf32>
    %35 = vector.extract_strided_slice %31 {offsets = [0, 384], sizes = [8, 128], strides = [1, 1]} : vector<8x512xf32> to vector<8x128xf32>
    %cst_17 = arith.constant 5.000000e-01 : f32
    %36 = vector.broadcast %cst_17 : f32 to vector<8x128xf32>
    %37 = arith.mulf %36, %32 : vector<8x128xf32>
    %38 = math.tanh %37 : vector<8x128xf32>
    %cst_18 = arith.constant 1.000000e+00 : f32
    %39 = vector.broadcast %cst_18 : f32 to vector<8x128xf32>
    %40 = arith.addf %38, %39 : vector<8x128xf32>
    %cst_19 = arith.constant 5.000000e-01 : f32
    %41 = vector.broadcast %cst_19 : f32 to vector<8x128xf32>
    %42 = arith.mulf %41, %40 : vector<8x128xf32>
    %43 = arith.mulf %42, %7 : vector<8x128xf32>
    %cst_20 = arith.constant 5.000000e-01 : f32
    %44 = vector.broadcast %cst_20 : f32 to vector<8x128xf32>
    %45 = arith.mulf %44, %33 : vector<8x128xf32>
    %46 = math.tanh %45 : vector<8x128xf32>
    %cst_21 = arith.constant 1.000000e+00 : f32
    %47 = vector.broadcast %cst_21 : f32 to vector<8x128xf32>
    %48 = arith.addf %46, %47 : vector<8x128xf32>
    %cst_22 = arith.constant 5.000000e-01 : f32
    %49 = vector.broadcast %cst_22 : f32 to vector<8x128xf32>
    %50 = arith.mulf %49, %48 : vector<8x128xf32>
    %51 = math.tanh %35 : vector<8x128xf32>
    %52 = arith.mulf %50, %51 : vector<8x128xf32>
    %53 = arith.addf %43, %52 : vector<8x128xf32>
    %cst_23 = arith.constant 5.000000e-01 : f32
    %54 = vector.broadcast %cst_23 : f32 to vector<8x128xf32>
    %55 = arith.mulf %54, %34 : vector<8x128xf32>
    %56 = math.tanh %55 : vector<8x128xf32>
    %cst_24 = arith.constant 1.000000e+00 : f32
    %57 = vector.broadcast %cst_24 : f32 to vector<8x128xf32>
    %58 = arith.addf %56, %57 : vector<8x128xf32>
    %cst_25 = arith.constant 5.000000e-01 : f32
    %59 = vector.broadcast %cst_25 : f32 to vector<8x128xf32>
    %60 = arith.mulf %59, %58 : vector<8x128xf32>
    %cst_26 = arith.constant dense<0.000000e+00> : vector<128xf32>
    %61 = vector.multi_reduction <add>, %53, %cst_26 [0] : vector<8x128xf32> to vector<128xf32>
    %62 = vector.shape_cast %61 : vector<128xf32> to vector<1x128xf32>
    %63 = vector.broadcast %cst : f32 to vector<1x128xf32>
    %64 = arith.mulf %62, %63 : vector<1x128xf32>
    %65 = vector.broadcast %64 : vector<1x128xf32> to vector<8x128xf32>
    %66 = arith.subf %53, %65 : vector<8x128xf32>
    %67 = arith.mulf %66, %66 : vector<8x128xf32>
    %cst_27 = arith.constant dense<0.000000e+00> : vector<128xf32>
    %68 = vector.multi_reduction <add>, %67, %cst_27 [0] : vector<8x128xf32> to vector<128xf32>
    %69 = vector.shape_cast %68 : vector<128xf32> to vector<1x128xf32>
    %70 = vector.broadcast %cst : f32 to vector<1x128xf32>
    %71 = arith.mulf %69, %70 : vector<1x128xf32>
    %72 = vector.broadcast %5 : vector<1x128xf32> to vector<8x128xf32>
    %73 = arith.mulf %72, %66 : vector<8x128xf32>
    %cst_28 = arith.constant 9.99999974E-6 : f32
    %74 = vector.broadcast %cst_28 : f32 to vector<1x128xf32>
    %75 = arith.addf %71, %74 : vector<1x128xf32>
    %76 = math.rsqrt %75 : vector<1x128xf32>
    %77 = vector.broadcast %76 : vector<1x128xf32> to vector<8x128xf32>
    %78 = arith.mulf %73, %77 : vector<8x128xf32>
    %79 = math.tanh %78 : vector<8x128xf32>
    %80 = arith.mulf %60, %79 : vector<8x128xf32>
    %81 = arith.truncf %80 : vector<8x128xf32> to vector<8x128xbf16>
    %c0_29 = arith.constant 0 : index
    %c0_30 = arith.constant 0 : index
    %82 = vector.load %arg9[%c0_29, %c0_30] : memref<8x128xbf16, #tpu.memory_space<vmem>>, vector<8x128xbf16>
    tpu.vector_store %arg9[%c0_29, %c0_30], %81 {strides = array<i32>} : memref<8x128xbf16, #tpu.memory_space<vmem>>, vector<8x128xbf16>,
    %c0_31 = arith.constant 0 : index
    %c0_32 = arith.constant 0 : index
    %83 = vector.load %arg10[%c0_31, %c0_32] : memref<8x128xf32, #tpu.memory_space<vmem>>, vector<8x128xf32>
    tpu.vector_store %arg10[%c0_31, %c0_32], %53 {strides = array<i32>} : memref<8x128xf32, #tpu.memory_space<vmem>>, vector<8x128xf32>,
    %84 = arith.truncf %80 : vector<8x128xf32> to vector<8x128xbf16>
    %85 = arith.index_cast %c0_i32_6 : i32 to index
    %c0_33 = arith.constant 0 : index
    %c0_34 = arith.constant 0 : index
    %86 = vector.load %arg7[%85, %c0_33, %c0_34] : memref<1x8x128xbf16, #tpu.memory_space<vmem>>, vector<1x8x128xbf16>
    %87 = vector.shape_cast %86 : vector<1x8x128xbf16> to vector<8x128xbf16>
    %88 = vector.shape_cast %84 : vector<8x128xbf16> to vector<1x8x128xbf16>
    tpu.vector_store %arg7[%85, %c0_33, %c0_34], %88 {strides = array<i32>} : memref<1x8x128xbf16, #tpu.memory_space<vmem>>, vector<1x8x128xbf16>,
    %89 = arith.truncf %53 : vector<8x128xf32> to vector<8x128xbf16>
    %90 = arith.index_cast %c0_i32_6 : i32 to index
    %c0_35 = arith.constant 0 : index
    %c0_36 = arith.constant 0 : index
    %91 = vector.load %arg8[%90, %c0_35, %c0_36] : memref<1x8x128xbf16, #tpu.memory_space<vmem>>, vector<1x8x128xbf16>
    %92 = vector.shape_cast %91 : vector<1x8x128xbf16> to vector<8x128xbf16>
    %93 = vector.shape_cast %89 : vector<8x128xbf16> to vector<1x8x128xbf16>
    tpu.vector_store %arg8[%90, %c0_35, %c0_36], %93 {strides = array<i32>} : memref<1x8x128xbf16, #tpu.memory_space<vmem>>, vector<1x8x128xbf16>,
    %c1_i32 = arith.constant 1 : i32
    return
  }
  func.func @transform_0(%arg0: i32) -> (i32, i32, i32) {
    %c0_i32 = arith.constant 0 : i32
    %c0_i32_0 = arith.constant 0 : i32
    %c0_i32_1 = arith.constant 0 : i32
    return %arg0, %c0_i32, %c0_i32_0 : i32, i32, i32
  }
  func.func @transform_1(%arg0: i32) -> (i32, i32) {
    %c0_i32 = arith.constant 0 : i32
    %c0_i32_0 = arith.constant 0 : i32
    %c0_i32_1 = arith.constant 0 : i32
    return %c0_i32, %c0_i32_0 : i32, i32
  }
  func.func @transform_2(%arg0: i32) -> (i32, i32) {
    %c0_i32 = arith.constant 0 : i32
    %c0_i32_0 = arith.constant 0 : i32
    %c0_i32_1 = arith.constant 0 : i32
    return %c0_i32, %c0_i32_0 : i32, i32
  }
  func.func @transform_3(%arg0: i32) -> (i32, i32) {
    %c0_i32 = arith.constant 0 : i32
    %c0_i32_0 = arith.constant 0 : i32
    %c0_i32_1 = arith.constant 0 : i32
    return %c0_i32, %c0_i32_0 : i32, i32
  }
  func.func @transform_4(%arg0: i32) -> (i32, i32) {
    %c0_i32 = arith.constant 0 : i32
    %c0_i32_0 = arith.constant 0 : i32
    %c0_i32_1 = arith.constant 0 : i32
    return %c0_i32, %c0_i32_0 : i32, i32
  }
  func.func @transform_5(%arg0: i32) -> (i32, i32) {
    %c0_i32 = arith.constant 0 : i32
    %c0_i32_0 = arith.constant 0 : i32
    %c0_i32_1 = arith.constant 0 : i32
    return %c0_i32, %c0_i32_0 : i32, i32
  }
  func.func @transform_6(%arg0: i32) -> (i32, i32, i32) {
    %c0_i32 = arith.constant 0 : i32
    %c0_i32_0 = arith.constant 0 : i32
    %c0_i32_1 = arith.constant 0 : i32
    return %arg0, %c0_i32, %c0_i32_0 : i32, i32, i32
  }
  func.func @transform_7(%arg0: i32) -> (i32, i32, i32) {
    %c0_i32 = arith.constant 0 : i32
    %c0_i32_0 = arith.constant 0 : i32
    %c0_i32_1 = arith.constant 0 : i32
    return %arg0, %c0_i32, %c0_i32_0 : i32, i32, i32
  }
}

</mosaic_0001>

<llo_original>
// kernel: tpu_custom_call.1
$region0: #{tpu_custom_call.1}
  #allocation0 [shape = 'u32[]', space=smem, size = 0x4, offset = 0x4, fixed_abs, tag = 'smem constant byte address 0x4 - core index']
  #allocation1 [shape = 'u32[144,128]{1,0:T(1,128)}', space=vmem, size = 0x12000, scoped, tag = 'internal scratch']
  #allocation2 [shape = 'bf16[8,128]{1,0:T(8,128)(2,1)}', space=vmem, size = 0x800, scoped, tag = 'scratch operand']
  #allocation3 [shape = 'f32[8,128]{1,0:T(8,128)}', space=vmem, size = 0x1000, scoped, tag = 'scratch operand']
  %s0 = inlined_call_operand.hbm [shape: bf16[1,8,512], index: 0, kind: input, shape index: {}]
  %s1 = inlined_call_operand.hbm [shape: f32[8,128], index: 1, kind: input, shape index: {}]
  %s2 = inlined_call_operand.hbm [shape: f32[8,128], index: 2, kind: input, shape index: {}]
  %s3 = inlined_call_operand.hbm [shape: bf16[128,512], index: 3, kind: input, shape index: {}]
  %s4 = inlined_call_operand.vmem [shape: f32[1,512], index: 4, kind: input, shape index: {}]
  %s5 = inlined_call_operand.vmem [shape: f32[1,128], index: 5, kind: input, shape index: {}]
  %s6 = inlined_call_operand.hbm [shape: bf16[1,8,128], index: 6, kind: output, shape index: {0}]
  %s7 = inlined_call_operand.hbm [shape: bf16[1,8,128], index: 7, kind: output, shape index: {1}]
  %8 = xla_tuple %s6, %s7
  %s9 = sld [smem:[#allocation0]]
  $region62: #{tpu_custom_call.1} parent=0
    _
  %s11 = ssub.s32 1, %s9
  %s12 = scalar_select 0, %s11, %s9
  $region1: #{tpu_custom_call.1} parent=0
    #allocation4 [shape = 'u8[8192]{0}', space=vmem, size = 0x2000, scoped, tag = 'input window, operand 0, single buffered']
    #allocation5 [shape = 's32[1]{0}', space=sflag, size = 0x4, scoped, tag = 'scoped memory for tpu_custom_call.1']
    #allocation6 [shape = 's32[1]{0}', space=sflag, size = 0x4, scoped, tag = 'scoped memory for tpu_custom_call.1']
    #allocation7 [shape = 'u8[4096]{0}', space=vmem, size = 0x1000, scoped, tag = 'input window, operand 1, single buffered']
    #allocation8 [shape = 's32[1]{0}', space=sflag, size = 0x4, scoped, tag = 'scoped memory for tpu_custom_call.1']
    #allocation9 [shape = 'u8[4096]{0}', space=vmem, size = 0x1000, scoped, tag = 'input window, operand 2, single buffered']
    #allocation10 [shape = 'u8[131072]{0}', space=vmem, size = 0x20000, scoped, tag = 'input window, operand 3, single buffered']
    #allocation11 [shape = 's32[1]{0}', space=sflag, size = 0x4, scoped, tag = 'scoped memory for tpu_custom_call.1']
    #allocation12 [shape = 'u8[2048]{0}', space=vmem, size = 0x800, scoped, tag = 'output window, operand 0, single buffered']
    #allocation13 [shape = 'u8[2048]{0}', space=vmem, size = 0x800, scoped, tag = 'output window, operand 1, single buffered']
    #allocation14 [shape = 's32[1]{0}', space=sflag, size = 0x4, scoped, tag = 'scoped memory for tpu_custom_call.1']
    %13 = vsyncpa [#allocation5], 0
    %14 = vsyncpa [#allocation8], 0
    %15 = vsyncpa [#allocation11], 0
    %16 = vsyncpa [#allocation6], 0
    %17 = vsyncpa [#allocation14], 0
    // Predicated region
    $region2: #{tpu_custom_call.1} parent=1 // pred_check
      _
    $region3: #{tpu_custom_call.1} parent=1 // pred_check_branch
      %19 = sbr.rel (0) target = $region5
    $region4: #{tpu_custom_call.1} parent=1 // pred_region
      %s21 = ssub.s32 256, 256
      %22 = vsyncadd [#allocation5], %s21
      %s24 = sshll.u32 [#allocation4], 4
      %s25 = int_to_ptr.vmem [resolvable:$true] %s24
      %27 = dma.hbm_to_vmem [thread:$0]  %s0, 256, %s25, [#allocation5]
    $region5: #{tpu_custom_call.1} parent=1 // pred_fallthru
      _
    // Predicated region
    $region6: #{tpu_custom_call.1} parent=1 // pred_check
      _
    $region7: #{tpu_custom_call.1} parent=1 // pred_check_branch
      %29 = sbr.rel (0) target = $region9
    $region8: #{tpu_custom_call.1} parent=1 // pred_region
      %s31 = ssub.s32 128, 128
      %32 = vsyncadd [#allocation8], %s31
      %s34 = sshll.u32 [#allocation7], 4
      %s35 = int_to_ptr.vmem [resolvable:$true] %s34
      %37 = dma.hbm_to_vmem [thread:$0]  %s1, 128, %s35, [#allocation8]
    $region9: #{tpu_custom_call.1} parent=1 // pred_fallthru
      _
    // Predicated region
    $region10: #{tpu_custom_call.1} parent=1 // pred_check
      _
    $region11: #{tpu_custom_call.1} parent=1 // pred_check_branch
      %39 = sbr.rel (0) target = $region13
    $region12: #{tpu_custom_call.1} parent=1 // pred_region
      %s41 = ssub.s32 128, 128
      %42 = vsyncadd [#allocation8], %s41
      %s44 = sshll.u32 [#allocation9], 4
      %s45 = int_to_ptr.vmem [resolvable:$true] %s44
      %47 = dma.hbm_to_vmem [thread:$0]  %s2, 128, %s45, [#allocation8]
    $region13: #{tpu_custom_call.1} parent=1 // pred_fallthru
      _
    // Predicated region
    $region14: #{tpu_custom_call.1} parent=1 // pred_check
      _
    $region15: #{tpu_custom_call.1} parent=1 // pred_check_branch
      %49 = sbr.rel (0) target = $region17
    $region16: #{tpu_custom_call.1} parent=1 // pred_region
      %s51 = ssub.s32 4096, 4096
      %52 = vsyncadd [#allocation11], %s51
      %s53 = sshll.u32 [#allocation10], 4
      %s54 = int_to_ptr.vmem [resolvable:$true] %s53
      %59 = dma.hbm_to_vmem [thread:$0]  %s3, 4096, %s54, [#allocation11], 256, 256, 16
    $region17: #{tpu_custom_call.1} parent=1 // pred_fallthru
      _
    // Predicated region
    $region18: #{tpu_custom_call.1} parent=1 // pred_check
      _
    $region19: #{tpu_custom_call.1} parent=1 // pred_check_branch
      %61 = sbr.rel (0) target = $region21
    $region20: #{tpu_custom_call.1} parent=1 // pred_region
      _
    $region21: #{tpu_custom_call.1} parent=1 // pred_fallthru
      _
    // Predicated region
    $region22: #{tpu_custom_call.1} parent=1 // pred_check
      _
    $region23: #{tpu_custom_call.1} parent=1 // pred_check_branch
      %63 = sbr.rel (0) target = $region25
    $region24: #{tpu_custom_call.1} parent=1 // pred_region
      _
    $region25: #{tpu_custom_call.1} parent=1 // pred_fallthru
      _
    // Predicated region
    $region26: #{tpu_custom_call.1} parent=1 // pred_check
      _
    $region27: #{tpu_custom_call.1} parent=1 // pred_check_branch
      %65 = sbr.rel (0) target = $region29
    $region28: #{tpu_custom_call.1} parent=1 // pred_region
      %66 = dma.done [#allocation5], 256
    $region29: #{tpu_custom_call.1} parent=1 // pred_fallthru
      _
    // Predicated region
    $region30: #{tpu_custom_call.1} parent=1 // pred_check
      _
    $region31: #{tpu_custom_call.1} parent=1 // pred_check_branch
      %68 = sbr.rel (0) target = $region33
    $region32: #{tpu_custom_call.1} parent=1 // pred_region
      %69 = dma.done [#allocation8], 128
    $region33: #{tpu_custom_call.1} parent=1 // pred_fallthru
      _
    // Predicated region
    $region34: #{tpu_custom_call.1} parent=1 // pred_check
      _
    $region35: #{tpu_custom_call.1} parent=1 // pred_check_branch
      %71 = sbr.rel (0) target = $region37
    $region36: #{tpu_custom_call.1} parent=1 // pred_region
      %72 = dma.done [#allocation8], 128
    $region37: #{tpu_custom_call.1} parent=1 // pred_fallthru
      _
    // Predicated region
    $region38: #{tpu_custom_call.1} parent=1 // pred_check
      _
    $region39: #{tpu_custom_call.1} parent=1 // pred_check_branch
      %74 = sbr.rel (0) target = $region41
    $region40: #{tpu_custom_call.1} parent=1 // pred_region
      %75 = dma.done [#allocation11], 4096
    $region41: #{tpu_custom_call.1} parent=1 // pred_fallthru
      _
    %p77 = scmp.eq.s32.totalorder 0, 0
    // Predicated region
    $region42: #{tpu_custom_call.1} parent=1 // pred_check
      %p78 = pneg %p77
    $region43: #{tpu_custom_call.1} parent=1 // pred_check_branch
      %80 = sbr.rel (%p78) target = $region45
    $region44: #{tpu_custom_call.1} parent=1 // pred_region
      %v81 = vld [vmem:[#allocation7] sm:$0xff]
      %v82 = vpack.c.bf16 %v81, %v81
      %83 = vst [vmem:[#allocation2] sm:$0xf] %v82
      %v84 = vld [vmem:[#allocation9] sm:$0xff]
      %85 = vst [vmem:[#allocation3] sm:$0xff] %v84
    $region45: #{tpu_custom_call.1} parent=1 // pred_fallthru
      _
    %v86 = vld [vmem:[#allocation10] sm:$0xff]
    %v87 = vld [vmem:[#allocation10 + $0x8] sm:$0xff]
    %v88 = vld [vmem:[#allocation10 + $0x10] sm:$0xff]
    %v89 = vld [vmem:[#allocation10 + $0x18] sm:$0xff]
    %v90 = vld [vmem:[#allocation10 + $0x20] sm:$0xff]
    %v91 = vld [vmem:[#allocation10 + $0x28] sm:$0xff]
    %v92 = vld [vmem:[#allocation10 + $0x30] sm:$0xff]
    %v93 = vld [vmem:[#allocation10 + $0x38] sm:$0xff]
    %v94 = vld [vmem:[#allocation10 + $0x40] sm:$0xff]
    %v95 = vld [vmem:[#allocation10 + $0x48] sm:$0xff]
    %v96 = vld [vmem:[#allocation10 + $0x50] sm:$0xff]
    %v97 = vld [vmem:[#allocation10 + $0x58] sm:$0xff]
    %v98 = vld [vmem:[#allocation10 + $0x60] sm:$0xff]
    %v99 = vld [vmem:[#allocation10 + $0x68] sm:$0xff]
    %v100 = vld [vmem:[#allocation10 + $0x70] sm:$0xff]
    %v101 = vld [vmem:[#allocation10 + $0x78] sm:$0xff]
    %v102 = vld [vmem:[#allocation10 + $0x80] sm:$0xff]
    %v103 = vld [vmem:[#allocation10 + $0x88] sm:$0xff]
    %v104 = vld [vmem:[#allocation10 + $0x90] sm:$0xff]
    %v105 = vld [vmem:[#allocation10 + $0x98] sm:$0xff]
    %v106 = vld [vmem:[#allocation10 + $0xa0] sm:$0xff]
    %v107 = vld [vmem:[#allocation10 + $0xa8] sm:$0xff]
    %v108 = vld [vmem:[#allocation10 + $0xb0] sm:$0xff]
    %v109 = vld [vmem:[#allocation10 + $0xb8] sm:$0xff]
    %v110 = vld [vmem:[#allocation10 + $0xc0] sm:$0xff]
    %v111 = vld [vmem:[#allocation10 + $0xc8] sm:$0xff]
    %v112 = vld [vmem:[#allocation10 + $0xd0] sm:$0xff]
    %v113 = vld [vmem:[#allocation10 + $0xd8] sm:$0xff]
    %v114 = vld [vmem:[#allocation10 + $0xe0] sm:$0xff]
    %v115 = vld [vmem:[#allocation10 + $0xe8] sm:$0xff]
    %v116 = vld [vmem:[#allocation10 + $0xf0] sm:$0xff]
    %v117 = vld [vmem:[#allocation10 + $0xf8] sm:$0xff]
    %v118 = vld [vmem:[%s4] sm:$0xf]
    %v119 = vld [vmem:[%s5] sm:$0x1]
    %v120 = vld [vmem:[#allocation2] sm:$0xf]
    %v121 = vld [vmem:[#allocation3] sm:$0xff]
    %v154 = vunpack.c.l.b16 %v86
    %v155 = vunpack.c.h.b16 %v86
    %v156 = vunpack.c.l.b16 %v87
    %v157 = vunpack.c.h.b16 %v87
    %v158 = vunpack.c.l.b16 %v88
    %v159 = vunpack.c.h.b16 %v88
    %v160 = vunpack.c.l.b16 %v89
    %v161 = vunpack.c.h.b16 %v89
    %v162 = vunpack.c.l.b16 %v90
    %v163 = vunpack.c.h.b16 %v90
    %v164 = vunpack.c.l.b16 %v91
    %v165 = vunpack.c.h.b16 %v91
    %v166 = vunpack.c.l.b16 %v92
    %v167 = vunpack.c.h.b16 %v92
    %v168 = vunpack.c.l.b16 %v93
    %v169 = vunpack.c.h.b16 %v93
    %v170 = vunpack.c.l.b16 %v94
    %v171 = vunpack.c.h.b16 %v94
    %v172 = vunpack.c.l.b16 %v95
    %v173 = vunpack.c.h.b16 %v95
    %v174 = vunpack.c.l.b16 %v96
    %v175 = vunpack.c.h.b16 %v96
    %v176 = vunpack.c.l.b16 %v97
    %v177 = vunpack.c.h.b16 %v97
    %v178 = vunpack.c.l.b16 %v98
    %v179 = vunpack.c.h.b16 %v98
    %v180 = vunpack.c.l.b16 %v99
    %v181 = vunpack.c.h.b16 %v99
    %v182 = vunpack.c.l.b16 %v100
    %v183 = vunpack.c.h.b16 %v100
    %v184 = vunpack.c.l.b16 %v101
    %v185 = vunpack.c.h.b16 %v101
    %v186 = vunpack.c.l.b16 %v102
    %v187 = vunpack.c.h.b16 %v102
    %v188 = vunpack.c.l.b16 %v103
    %v189 = vunpack.c.h.b16 %v103
    %v190 = vunpack.c.l.b16 %v104
    %v191 = vunpack.c.h.b16 %v104
    %v192 = vunpack.c.l.b16 %v105
    %v193 = vunpack.c.h.b16 %v105
    %v194 = vunpack.c.l.b16 %v106
    %v195 = vunpack.c.h.b16 %v106
    %v196 = vunpack.c.l.b16 %v107
    %v197 = vunpack.c.h.b16 %v107
    %v198 = vunpack.c.l.b16 %v108
    %v199 = vunpack.c.h.b16 %v108
    %v200 = vunpack.c.l.b16 %v109
    %v201 = vunpack.c.h.b16 %v109
    %v202 = vunpack.c.l.b16 %v110
    %v203 = vunpack.c.h.b16 %v110
    %v204 = vunpack.c.l.b16 %v111
    %v205 = vunpack.c.h.b16 %v111
    %v206 = vunpack.c.l.b16 %v112
    %v207 = vunpack.c.h.b16 %v112
    %v208 = vunpack.c.l.b16 %v113
    %v209 = vunpack.c.h.b16 %v113
    %v210 = vunpack.c.l.b16 %v114
    %v211 = vunpack.c.h.b16 %v114
    %v212 = vunpack.c.l.b16 %v115
    %v213 = vunpack.c.h.b16 %v115
    %v214 = vunpack.c.l.b16 %v116
    %v215 = vunpack.c.h.b16 %v116
    %v216 = vunpack.c.l.b16 %v117
    %v217 = vunpack.c.h.b16 %v117
    %v218 = vpack.c.b16 %v158, %v154
    %v219 = vpack.c.b16 %v159, %v155
    %v220 = vpack.c.b16 %v160, %v156
    %v221 = vpack.c.b16 %v161, %v157
    %v222 = vpack.c.b16 %v166, %v162
    %v223 = vpack.c.b16 %v167, %v163
    %v224 = vpack.c.b16 %v168, %v164
    %v225 = vpack.c.b16 %v169, %v165
    %v226 = vpack.c.b16 %v174, %v170
    %v227 = vpack.c.b16 %v175, %v171
    %v228 = vpack.c.b16 %v176, %v172
    %v229 = vpack.c.b16 %v177, %v173
    %v230 = vpack.c.b16 %v182, %v178
    %v231 = vpack.c.b16 %v183, %v179
    %v232 = vpack.c.b16 %v184, %v180
    %v233 = vpack.c.b16 %v185, %v181
    %v234 = vpack.c.b16 %v190, %v186
    %v235 = vpack.c.b16 %v191, %v187
    %v236 = vpack.c.b16 %v192, %v188
    %v237 = vpack.c.b16 %v193, %v189
    %v238 = vpack.c.b16 %v198, %v194
    %v239 = vpack.c.b16 %v199, %v195
    %v240 = vpack.c.b16 %v200, %v196
    %v241 = vpack.c.b16 %v201, %v197
    %v242 = vpack.c.b16 %v206, %v202
    %v243 = vpack.c.b16 %v207, %v203
    %v244 = vpack.c.b16 %v208, %v204
    %v245 = vpack.c.b16 %v209, %v205
    %v246 = vpack.c.b16 %v214, %v210
    %v247 = vpack.c.b16 %v215, %v211
    %v248 = vpack.c.b16 %v216, %v212
    %v249 = vpack.c.b16 %v217, %v213
    %282 = vmatprep.subr.bf16.mxu0 %v247
    %283 = vmatpush1.bf16.msra.mxu0 %v246
    %284 = vmatprep.subr.bf16.mxu0 %v243
    %285 = vmatpush1.bf16.msra.mxu0 %v242
    %286 = vmatprep.subr.bf16.mxu0 %v239
    %287 = vmatpush1.bf16.msra.mxu0 %v238
    %288 = vmatprep.subr.bf16.mxu0 %v235
    %289 = vmatpush1.bf16.msra.mxu0 %v234
    %290 = vmatprep.subr.bf16.mxu0 %v231
    %291 = vmatpush1.bf16.msra.mxu0 %v230
    %292 = vmatprep.subr.bf16.mxu0 %v227
    %293 = vmatpush1.bf16.msra.mxu0 %v226
    %294 = vmatprep.subr.bf16.mxu0 %v223
    %295 = vmatpush1.bf16.msra.mxu0 %v222
    %296 = vmatprep.subr.bf16.mxu0 %v219
    %297 = vmatpush1.bf16.msra.mxu0 %v218
    %298 = vmatprep.subr.bf16.mxu0 0
    %299 = vmatpush2.bf16.msra.mxu0 0
    %300 = vmatprep.subr.bf16.mxu0 0
    %301 = vmatpush2.bf16.msra.mxu0 0
    %302 = vmatprep.subr.bf16.mxu0 0
    %303 = vmatpush2.bf16.msra.mxu0 0
    %304 = vmatprep.subr.bf16.mxu0 0
    %305 = vmatpush2.bf16.msra.mxu0 0
    %306 = vmatprep.subr.bf16.mxu0 0
    %307 = vmatpush2.bf16.msra.mxu0 0
    %308 = vmatprep.subr.bf16.mxu0 0
    %309 = vmatpush2.bf16.msra.mxu0 0
    %310 = vmatprep.subr.bf16.mxu0 0
    %311 = vmatpush2.bf16.msra.mxu0 0
    %312 = vmatprep.subr.bf16.mxu0 0
    %313 = vmatpush2.bf16.msra.mxu0 0
    %314 = vmatprep.mubr.bf16.mxu0 0
    %315 = vmatmul.mubr.bf16.gmra.mxu0 %v120
    %v316 = vpop.f32.mrf.mxu0
    %v317 = vadd.f32 0.0, %v316
    %v318 = vpop.f32.mrf.mxu0
    %v319 = vadd.f32 0.0, %v318
    %v320 = vpop.f32.mrf.mxu0
    %v321 = vpop.f32.mrf.mxu0
    %322 = vdwg.mxu0
    %323 = vmatprep.subr.bf16.mxu0 %v249
    %324 = vmatpush1.bf16.msra.mxu0 %v248
    %325 = vmatprep.subr.bf16.mxu0 %v245
    %326 = vmatpush1.bf16.msra.mxu0 %v244
    %327 = vmatprep.subr.bf16.mxu0 %v241
    %328 = vmatpush1.bf16.msra.mxu0 %v240
    %329 = vmatprep.subr.bf16.mxu0 %v237
    %330 = vmatpush1.bf16.msra.mxu0 %v236
    %331 = vmatprep.subr.bf16.mxu0 %v233
    %332 = vmatpush1.bf16.msra.mxu0 %v232
    %333 = vmatprep.subr.bf16.mxu0 %v229
    %334 = vmatpush1.bf16.msra.mxu0 %v228
    %335 = vmatprep.subr.bf16.mxu0 %v225
    %336 = vmatpush1.bf16.msra.mxu0 %v224
    %337 = vmatprep.subr.bf16.mxu0 %v221
    %338 = vmatpush1.bf16.msra.mxu0 %v220
    %339 = vmatprep.subr.bf16.mxu0 0
    %340 = vmatpush2.bf16.msra.mxu0 0
    %341 = vmatprep.subr.bf16.mxu0 0
    %342 = vmatpush2.bf16.msra.mxu0 0
    %343 = vmatprep.subr.bf16.mxu0 0
    %344 = vmatpush2.bf16.msra.mxu0 0
    %345 = vmatprep.subr.bf16.mxu0 0
    %346 = vmatpush2.bf16.msra.mxu0 0
    %347 = vmatprep.subr.bf16.mxu0 0
    %348 = vmatpush2.bf16.msra.mxu0 0
    %349 = vmatprep.subr.bf16.mxu0 0
    %350 = vmatpush2.bf16.msra.mxu0 0
    %351 = vmatprep.subr.bf16.mxu0 0
    %352 = vmatpush2.bf16.msra.mxu0 0
    %353 = vmatprep.subr.bf16.mxu0 0
    %354 = vmatpush2.bf16.msra.mxu0 0
    %355 = vmatprep.mubr.bf16.mxu0 0
    %356 = vmatmul.mubr.bf16.gmra.mxu0 %v120
    %v357 = vpop.f32.mrf.mxu0
    %v358 = vadd.f32 0.0, %v357
    %v359 = vpop.f32.mrf.mxu0
    %v360 = vadd.f32 0.0, %v359
    %v361 = vpop.f32.mrf.mxu0
    %v362 = vpop.f32.mrf.mxu0
    %363 = vdwg.mxu0
    %v364 = vrot.slane %v317, 4
    %v365 = vadd.f32 %v317, %v364
    %v366 = vrot.slane %v365, 2
    %v367 = vadd.f32 %v365, %v366
    %v368 = vrot.slane %v367, 1
    %v369 = vadd.f32 %v367, %v368
    %v370 = vrot.slane %v319, 4
    %v371 = vadd.f32 %v319, %v370
    %v372 = vrot.slane %v371, 2
    %v373 = vadd.f32 %v371, %v372
    %v374 = vrot.slane %v373, 1
    %v375 = vadd.f32 %v373, %v374
    %v376 = vrot.slane %v358, 4
    %v377 = vadd.f32 %v358, %v376
    %v378 = vrot.slane %v377, 2
    %v379 = vadd.f32 %v377, %v378
    %v380 = vrot.slane %v379, 1
    %v381 = vadd.f32 %v379, %v380
    %v382 = vrot.slane %v360, 4
    %v383 = vadd.f32 %v360, %v382
    %v384 = vrot.slane %v383, 2
    %v385 = vadd.f32 %v383, %v384
    %v386 = vrot.slane %v385, 1
    %v387 = vadd.f32 %v385, %v386
    %v388 = vmul.f32 %v369, 0.125
    %v389 = vmul.f32 %v375, 0.125
    %v390 = vmul.f32 %v381, 0.125
    %v391 = vmul.f32 %v387, 0.125
    %v392 = vsub.f32 %v317, %v388
    %v393 = vsub.f32 %v319, %v389
    %v394 = vsub.f32 %v358, %v390
    %v395 = vsub.f32 %v360, %v391
    %v396 = vmul.f32 %v392, %v392
    %v397 = vmul.f32 %v393, %v393
    %v398 = vmul.f32 %v394, %v394
    %v399 = vmul.f32 %v395, %v395
    %v400 = vrot.slane %v396, 4
    %v401 = vadd.f32 %v396, %v400
    %v402 = vrot.slane %v401, 2
    %v403 = vadd.f32 %v401, %v402
    %v404 = vrot.slane %v403, 1
    %v405 = vadd.f32 %v403, %v404
    %v406 = vrot.slane %v397, 4
    %v407 = vadd.f32 %v397, %v406
    %v408 = vrot.slane %v407, 2
    %v409 = vadd.f32 %v407, %v408
    %v410 = vrot.slane %v409, 1
    %v411 = vadd.f32 %v409, %v410
    %v412 = vrot.slane %v398, 4
    %v413 = vadd.f32 %v398, %v412
    %v414 = vrot.slane %v413, 2
    %v415 = vadd.f32 %v413, %v414
    %v416 = vrot.slane %v415, 1
    %v417 = vadd.f32 %v415, %v416
    %v418 = vrot.slane %v399, 4
    %v419 = vadd.f32 %v399, %v418
    %v420 = vrot.slane %v419, 2
    %v421 = vadd.f32 %v419, %v420
    %v422 = vrot.slane %v421, 1
    %v423 = vadd.f32 %v421, %v422
    %v424 = vmul.f32 %v405, 0.125
    %v425 = vmul.f32 %v411, 0.125
    %v426 = vmul.f32 %v417, 0.125
    %v427 = vmul.f32 %v423, 0.125
    %v429 = vlaneseq
    %v430 = vshrl.u32 %v429, 7
    %v431 = vsub.s32 0, %v430
    %v432 = vrot.slane %v118, %v431
    %v433 = vlaneseq
    %v434 = vshrl.u32 %v433, 7
    %v435 = vsub.s32 1, %v434
    %v436 = vrot.slane %v118, %v435
    %v437 = vlaneseq
    %v438 = vshrl.u32 %v437, 7
    %v439 = vsub.s32 2, %v438
    %v440 = vrot.slane %v118, %v439
    %v441 = vlaneseq
    %v442 = vshrl.u32 %v441, 7
    %v443 = vsub.s32 3, %v442
    %v444 = vrot.slane %v118, %v443
    %v449 = vmul.f32 %v432, %v392
    %v450 = vmul.f32 %v436, %v393
    %v451 = vmul.f32 %v440, %v394
    %v452 = vmul.f32 %v444, %v395
    %v453 = vadd.f32 %v424, 1e-05
    %v454 = vadd.f32 %v425, 1e-05
    %v455 = vadd.f32 %v426, 1e-05
    %v456 = vadd.f32 %v427, 1e-05
    %v457 = vrsqrt.pop %v453
    %v458 = vrsqrt.pop %v454
    %v459 = vrsqrt.pop %v455
    %v460 = vrsqrt.pop %v456
    %v461 = vmul.f32 %v449, %v457
    %v462 = vmul.f32 %v450, %v458
    %v463 = vmul.f32 %v451, %v459
    %v464 = vmul.f32 %v452, %v460
    %v465 = vld [vmem:[#allocation4] sm:$0xff]
    %v466 = vld [vmem:[#allocation4 + $0x8] sm:$0xff]
    %v467 = vunpack.c.l.bf16 %v465
    %v468 = vunpack.c.h.bf16 %v465
    %v469 = vunpack.c.l.bf16 %v466
    %v470 = vunpack.c.h.bf16 %v466
    %v471 = vadd.f32 %v461, %v467
    %v472 = vadd.f32 %v462, %v468
    %v473 = vadd.f32 %v463, %v469
    %v474 = vadd.f32 %v464, %v470
    %v475 = vmul.f32 %v471, 0.5
    %v476 = vtanh.pop %v475
    %v477 = vadd.f32 %v476, 1.0
    %v478 = vmul.f32 %v477, 0.5
    %v479 = vmul.f32 %v478, %v121
    %v480 = vmul.f32 %v472, 0.5
    %v481 = vtanh.pop %v480
    %v482 = vadd.f32 %v481, 1.0
    %v483 = vmul.f32 %v482, 0.5
    %v484 = vtanh.pop %v474
    %v485 = vmul.f32 %v483, %v484
    %v486 = vadd.f32 %v479, %v485
    %v487 = vmul.f32 %v473, 0.5
    %v488 = vtanh.pop %v487
    %v489 = vadd.f32 %v488, 1.0
    %v490 = vmul.f32 %v489, 0.5
    %v491 = vrot.slane %v486, 4
    %v492 = vadd.f32 %v486, %v491
    %v493 = vrot.slane %v492, 2
    %v494 = vadd.f32 %v492, %v493
    %v495 = vrot.slane %v494, 1
    %v496 = vadd.f32 %v494, %v495
    %v497 = vmul.f32 %v496, 0.125
    %v498 = vsub.f32 %v486, %v497
    %v499 = vmul.f32 %v498, %v498
    %v500 = vrot.slane %v499, 4
    %v501 = vadd.f32 %v499, %v500
    %v502 = vrot.slane %v501, 2
    %v503 = vadd.f32 %v501, %v502
    %v504 = vrot.slane %v503, 1
    %v505 = vadd.f32 %v503, %v504
    %v506 = vmul.f32 %v505, 0.125
    %v508 = vlaneseq
    %v509 = vshrl.u32 %v508, 7
    %v510 = vsub.s32 0, %v509
    %v511 = vrot.slane %v119, %v510
    %v513 = vmul.f32 %v511, %v498
    %v514 = vadd.f32 %v506, 1e-05
    %v515 = vrsqrt.pop %v514
    %v516 = vmul.f32 %v513, %v515
    %v517 = vtanh.pop %v516
    %v518 = vmul.f32 %v490, %v517
    %v519 = vpack.c.bf16 %v518, %v518
    %520 = vst [vmem:[#allocation2] sm:$0xf] %v519
    %521 = vst [vmem:[#allocation3] sm:$0xff] %v486
    %522 = vst [vmem:[#allocation12] sm:$0xf] %v519
    %v523 = vpack.c.bf16 %v486, %v486
    %524 = vst [vmem:[#allocation13] sm:$0xf] %v523
    // Predicated region
    $region46: #{tpu_custom_call.1} parent=1 // pred_check
      _
    $region47: #{tpu_custom_call.1} parent=1 // pred_check_branch
      %526 = sbr.rel (0) target = $region49
    $region48: #{tpu_custom_call.1} parent=1 // pred_region
      %s528 = ssub.s32 64, 64
      %529 = vsyncadd [#allocation6], %s528
      %s531 = sshll.u32 [#allocation12], 4
      %s532 = int_to_ptr.vmem [resolvable:$true] %s531
      %534 = dma.vmem_to_hbm [thread:$0]  %s532, 64, %s6, [#allocation6]
    $region49: #{tpu_custom_call.1} parent=1 // pred_fallthru
      _
    // Predicated region
    $region50: #{tpu_custom_call.1} parent=1 // pred_check
      _
    $region51: #{tpu_custom_call.1} parent=1 // pred_check_branch
      %536 = sbr.rel (0) target = $region53
    $region52: #{tpu_custom_call.1} parent=1 // pred_region
      %s538 = ssub.s32 64, 64
      %539 = vsyncadd [#allocation14], %s538
      %s541 = sshll.u32 [#allocation13], 4
      %s542 = int_to_ptr.vmem [resolvable:$true] %s541
      %544 = dma.vmem_to_hbm [thread:$0]  %s542, 64, %s7, [#allocation14]
    $region53: #{tpu_custom_call.1} parent=1 // pred_fallthru
      _
    // Predicated region
    $region54: #{tpu_custom_call.1} parent=1 // pred_check
      _
    $region55: #{tpu_custom_call.1} parent=1 // pred_check_branch
      %546 = sbr.rel (0) target = $region57
    $region56: #{tpu_custom_call.1} parent=1 // pred_region
      %547 = dma.done [#allocation6], 64
    $region57: #{tpu_custom_call.1} parent=1 // pred_fallthru
      _
    // Predicated region
    $region58: #{tpu_custom_call.1} parent=1 // pred_check
      _
    $region59: #{tpu_custom_call.1} parent=1 // pred_check_branch
      %549 = sbr.rel (0) target = $region61
    $region60: #{tpu_custom_call.1} parent=1 // pred_region
      %550 = dma.done [#allocation14], 64
    $region61: #{tpu_custom_call.1} parent=1 // pred_fallthru
      _
    %551 = vsyncpa [#allocation5], 1
    %552 = vsyncpa [#allocation8], 1
    %553 = vsyncpa [#allocation11], 1
    %554 = vsyncpa [#allocation6], 1
    %555 = vsyncpa [#allocation14], 1

// kernel: tpu_custom_call.1
$region0: #{tpu_custom_call.1}
  #allocation0 [shape = 'u32[]', space=smem, size = 0x4, offset = 0x4, fixed_abs, tag = 'smem constant byte address 0x4 - core index']
  #allocation1 [shape = 'u32[144,128]{1,0:T(1,128)}', space=vmem, size = 0x12000, scoped, tag = 'internal scratch']
  #allocation2 [shape = 'bf16[8,128]{1,0:T(8,128)(2,1)}', space=vmem, size = 0x800, scoped, tag = 'scratch operand']
  #allocation3 [shape = 'f32[8,128]{1,0:T(8,128)}', space=vmem, size = 0x1000, scoped, tag = 'scratch operand']
  %s0 = inlined_call_operand.hbm [shape: bf16[1,8,512], index: 0, kind: input, shape index: {}]
  %s1 = inlined_call_operand.hbm [shape: f32[8,128], index: 1, kind: input, shape index: {}]
  %s2 = inlined_call_operand.hbm [shape: f32[8,128], index: 2, kind: input, shape index: {}]
  %s3 = inlined_call_operand.hbm [shape: bf16[128,512], index: 3, kind: input, shape index: {}]
  %s4 = inlined_call_operand.vmem [shape: f32[1,512], index: 4, kind: input, shape index: {}]
  %s5 = inlined_call_operand.vmem [shape: f32[1,128], index: 5, kind: input, shape index: {}]
  %s6 = inlined_call_operand.hbm [shape: bf16[1,8,128], index: 6, kind: output, shape index: {0}]
  %s7 = inlined_call_operand.hbm [shape: bf16[1,8,128], index: 7, kind: output, shape index: {1}]
  %8 = xla_tuple %s6, %s7
  %s9 = sld [smem:[#allocation0]]
  $region62: #{tpu_custom_call.1} parent=0
    _
  %s11 = ssub.s32 1, %s9
  %s12 = scalar_select 0, %s11, %s9
  $region1: #{tpu_custom_call.1} parent=0
    #allocation4 [shape = 'u8[8192]{0}', space=vmem, size = 0x2000, scoped, tag = 'input window, operand 0, single buffered']
    #allocation5 [shape = 's32[1]{0}', space=sflag, size = 0x4, scoped, tag = 'scoped memory for tpu_custom_call.1']
    #allocation6 [shape = 's32[1]{0}', space=sflag, size = 0x4, scoped, tag = 'scoped memory for tpu_custom_call.1']
    #allocation7 [shape = 'u8[4096]{0}', space=vmem, size = 0x1000, scoped, tag = 'input window, operand 1, single buffered']
    #allocation8 [shape = 's32[1]{0}', space=sflag, size = 0x4, scoped, tag = 'scoped memory for tpu_custom_call.1']
    #allocation9 [shape = 'u8[4096]{0}', space=vmem, size = 0x1000, scoped, tag = 'input window, operand 2, single buffered']
    #allocation10 [shape = 'u8[131072]{0}', space=vmem, size = 0x20000, scoped, tag = 'input window, operand 3, single buffered']
    #allocation11 [shape = 's32[1]{0}', space=sflag, size = 0x4, scoped, tag = 'scoped memory for tpu_custom_call.1']
    #allocation12 [shape = 'u8[2048]{0}', space=vmem, size = 0x800, scoped, tag = 'output window, operand 0, single buffered']
    #allocation13 [shape = 'u8[2048]{0}', space=vmem, size = 0x800, scoped, tag = 'output window, operand 1, single buffered']
    #allocation14 [shape = 's32[1]{0}', space=sflag, size = 0x4, scoped, tag = 'scoped memory for tpu_custom_call.1']
    %13 = vsyncpa [#allocation5], 0
    %14 = vsyncpa [#allocation8], 0
    %15 = vsyncpa [#allocation11], 0
    %16 = vsyncpa [#allocation6], 0
    %17 = vsyncpa [#allocation14], 0
    // Predicated region
    $region2: #{tpu_custom_call.1} parent=1 // pred_check
      _
    $region3: #{tpu_custom_call.1} parent=1 // pred_check_branch
      %19 = sbr.rel (0) target = $region5
    $region4: #{tpu_custom_call.1} parent=1 // pred_region
      %s21 = ssub.s32 256, 256
      %22 = vsyncadd [#allocation5], %s21
      %s24 = sshll.u32 [#allocation4], 4
      %s25 = int_to_ptr.vmem [resolvable:$true] %s24
      %27 = dma.hbm_to_vmem [thread:$0]  %s0, 256, %s25, [#allocation5]
    $region5: #{tpu_custom_call.1} parent=1 // pred_fallthru
      _
    // Predicated region
    $region6: #{tpu_custom_call.1} parent=1 // pred_check
      _
    $region7: #{tpu_custom_call.1} parent=1 // pred_check_branch
      %29 = sbr.rel (0) target = $region9
    $region8: #{tpu_custom_call.1} parent=1 // pred_region
      %s31 = ssub.s32 128, 128
      %32 = vsyncadd [#allocation8], %s31
      %s34 = sshll.u32 [#allocation7], 4
      %s35 = int_to_ptr.vmem [resolvable:$true] %s34
      %37 = dma.hbm_to_vmem [thread:$0]  %s1, 128, %s35, [#allocation8]
    $region9: #{tpu_custom_call.1} parent=1 // pred_fallthru
      _
    // Predicated region
    $region10: #{tpu_custom_call.1} parent=1 // pred_check
      _
    $region11: #{tpu_custom_call.1} parent=1 // pred_check_branch
      %39 = sbr.rel (0) target = $region13
    $region12: #{tpu_custom_call.1} parent=1 // pred_region
      %s41 = ssub.s32 128, 128
      %42 = vsyncadd [#allocation8], %s41
      %s44 = sshll.u32 [#allocation9], 4
      %s45 = int_to_ptr.vmem [resolvable:$true] %s44
      %47 = dma.hbm_to_vmem [thread:$0]  %s2, 128, %s45, [#allocation8]
    $region13: #{tpu_custom_call.1} parent=1 // pred_fallthru
      _
    // Predicated region
    $region14: #{tpu_custom_call.1} parent=1 // pred_check
      _
    $region15: #{tpu_custom_call.1} parent=1 // pred_check_branch
      %49 = sbr.rel (0) target = $region17
    $region16: #{tpu_custom_call.1} parent=1 // pred_region
      %s51 = ssub.s32 4096, 4096
      %52 = vsyncadd [#allocation11], %s51
      %s53 = sshll.u32 [#allocation10], 4
      %s54 = int_to_ptr.vmem [resolvable:$true] %s53
      %59 = dma.hbm_to_vmem [thread:$0]  %s3, 4096, %s54, [#allocation11], 256, 256, 16
    $region17: #{tpu_custom_call.1} parent=1 // pred_fallthru
      _
    // Predicated region
    $region18: #{tpu_custom_call.1} parent=1 // pred_check
      _
    $region19: #{tpu_custom_call.1} parent=1 // pred_check_branch
      %61 = sbr.rel (0) target = $region21
    $region20: #{tpu_custom_call.1} parent=1 // pred_region
      _
    $region21: #{tpu_custom_call.1} parent=1 // pred_fallthru
      _
    // Predicated region
    $region22: #{tpu_custom_call.1} parent=1 // pred_check
      _
    $region23: #{tpu_custom_call.1} parent=1 // pred_check_branch
      %63 = sbr.rel (0) target = $region25
    $region24: #{tpu_custom_call.1} parent=1 // pred_region
      _
    $region25: #{tpu_custom_call.1} parent=1 // pred_fallthru
      _
    // Predicated region
    $region26: #{tpu_custom_call.1} parent=1 // pred_check
      _
    $region27: #{tpu_custom_call.1} parent=1 // pred_check_branch
      %65 = sbr.rel (0) target = $region29
    $region28: #{tpu_custom_call.1} parent=1 // pred_region
      %66 = dma.done [#allocation5], 256
    $region29: #{tpu_custom_call.1} parent=1 // pred_fallthru
      _
    // Predicated region
    $region30: #{tpu_custom_call.1} parent=1 // pred_check
      _
    $region31: #{tpu_custom_call.1} parent=1 // pred_check_branch
      %68 = sbr.rel (0) target = $region33
    $region32: #{tpu_custom_call.1} parent=1 // pred_region
      %69 = dma.done [#allocation8], 128
    $region33: #{tpu_custom_call.1} parent=1 // pred_fallthru
      _
    // Predicated region
    $region34: #{tpu_custom_call.1} parent=1 // pred_check
      _
    $region35: #{tpu_custom_call.1} parent=1 // pred_check_branch
      %71 = sbr.rel (0) target = $region37
    $region36: #{tpu_custom_call.1} parent=1 // pred_region
      %72 = dma.done [#allocation8], 128
    $region37: #{tpu_custom_call.1} parent=1 // pred_fallthru
      _
    // Predicated region
    $region38: #{tpu_custom_call.1} parent=1 // pred_check
      _
    $region39: #{tpu_custom_call.1} parent=1 // pred_check_branch
      %74 = sbr.rel (0) target = $region41
    $region40: #{tpu_custom_call.1} parent=1 // pred_region
      %75 = dma.done [#allocation11], 4096
    $region41: #{tpu_custom_call.1} parent=1 // pred_fallthru
      _
    %p77 = scmp.eq.s32.totalorder 0, 0
    // Predicated region
    $region42: #{tpu_custom_call.1} parent=1 // pred_check
      %p78 = pneg %p77
    $region43: #{tpu_custom_call.1} parent=1 // pred_check_branch
      %80 = sbr.rel (%p78) target = $region45
    $region44: #{tpu_custom_call.1} parent=1 // pred_region
      %v81 = vld [vmem:[#allocation7] sm:$0xff]
      %v82 = vpack.c.bf16 %v81, %v81
      %83 = vst [vmem:[#allocation2] sm:$0xf] %v82
      %v84 = vld [vmem:[#allocation9] sm:$0xff]
      %85 = vst [vmem:[#allocation3] sm:$0xff] %v84
    $region45: #{tpu_custom_call.1} parent=1 // pred_fallthru
      _
    %v86 = vld [vmem:[#allocation10] sm:$0xff]
    %v87 = vld [vmem:[#allocation10 + $0x8] sm:$0xff]
    %v88 = vld [vmem:[#allocation10 + $0x10] sm:$0xff]
    %v89 = vld [vmem:[#allocation10 + $0x18] sm:$0xff]
    %v90 = vld [vmem:[#allocation10 + $0x20] sm:$0xff]
    %v91 = vld [vmem:[#allocation10 + $0x28] sm:$0xff]
    %v92 = vld [vmem:[#allocation10 + $0x30] sm:$0xff]
    %v93 = vld [vmem:[#allocation10 + $0x38] sm:$0xff]
    %v94 = vld [vmem:[#allocation10 + $0x40] sm:$0xff]
    %v95 = vld [vmem:[#allocation10 + $0x48] sm:$0xff]
    %v96 = vld [vmem:[#allocation10 + $0x50] sm:$0xff]
    %v97 = vld [vmem:[#allocation10 + $0x58] sm:$0xff]
    %v98 = vld [vmem:[#allocation10 + $0x60] sm:$0xff]
    %v99 = vld [vmem:[#allocation10 + $0x68] sm:$0xff]
    %v100 = vld [vmem:[#allocation10 + $0x70] sm:$0xff]
    %v101 = vld [vmem:[#allocation10 + $0x78] sm:$0xff]
    %v102 = vld [vmem:[#allocation10 + $0x80] sm:$0xff]
    %v103 = vld [vmem:[#allocation10 + $0x88] sm:$0xff]
    %v104 = vld [vmem:[#allocation10 + $0x90] sm:$0xff]
    %v105 = vld [vmem:[#allocation10 + $0x98] sm:$0xff]
    %v106 = vld [vmem:[#allocation10 + $0xa0] sm:$0xff]
    %v107 = vld [vmem:[#allocation10 + $0xa8] sm:$0xff]
    %v108 = vld [vmem:[#allocation10 + $0xb0] sm:$0xff]
    %v109 = vld [vmem:[#allocation10 + $0xb8] sm:$0xff]
    %v110 = vld [vmem:[#allocation10 + $0xc0] sm:$0xff]
    %v111 = vld [vmem:[#allocation10 + $0xc8] sm:$0xff]
    %v112 = vld [vmem:[#allocation10 + $0xd0] sm:$0xff]
    %v113 = vld [vmem:[#allocation10 + $0xd8] sm:$0xff]
    %v114 = vld [vmem:[#allocation10 + $0xe0] sm:$0xff]
    %v115 = vld [vmem:[#allocation10 + $0xe8] sm:$0xff]
    %v116 = vld [vmem:[#allocation10 + $0xf0] sm:$0xff]
    %v117 = vld [vmem:[#allocation10 + $0xf8] sm:$0xff]
    %v118 = vld [vmem:[%s4] sm:$0xf]
    %v119 = vld [vmem:[%s5] sm:$0x1]
    %v120 = vld [vmem:[#allocation2] sm:$0xf]
    %v121 = vld [vmem:[#allocation3] sm:$0xff]
    %v154 = vunpack.c.l.b16 %v86
    %v155 = vunpack.c.h.b16 %v86
    %v156 = vunpack.c.l.b16 %v87
    %v157 = vunpack.c.h.b16 %v87
    %v158 = vunpack.c.l.b16 %v88
    %v159 = vunpack.c.h.b16 %v88
    %v160 = vunpack.c.l.b16 %v89
    %v161 = vunpack.c.h.b16 %v89
    %v162 = vunpack.c.l.b16 %v90
    %v163 = vunpack.c.h.b16 %v90
    %v164 = vunpack.c.l.b16 %v91
    %v165 = vunpack.c.h.b16 %v91
    %v166 = vunpack.c.l.b16 %v92
    %v167 = vunpack.c.h.b16 %v92
    %v168 = vunpack.c.l.b16 %v93
    %v169 = vunpack.c.h.b16 %v93
    %v170 = vunpack.c.l.b16 %v94
    %v171 = vunpack.c.h.b16 %v94
    %v172 = vunpack.c.l.b16 %v95
    %v173 = vunpack.c.h.b16 %v95
    %v174 = vunpack.c.l.b16 %v96
    %v175 = vunpack.c.h.b16 %v96
    %v176 = vunpack.c.l.b16 %v97
    %v177 = vunpack.c.h.b16 %v97
    %v178 = vunpack.c.l.b16 %v98
    %v179 = vunpack.c.h.b16 %v98
    %v180 = vunpack.c.l.b16 %v99
    %v181 = vunpack.c.h.b16 %v99
    %v182 = vunpack.c.l.b16 %v100
    %v183 = vunpack.c.h.b16 %v100
    %v184 = vunpack.c.l.b16 %v101
    %v185 = vunpack.c.h.b16 %v101
    %v186 = vunpack.c.l.b16 %v102
    %v187 = vunpack.c.h.b16 %v102
    %v188 = vunpack.c.l.b16 %v103
    %v189 = vunpack.c.h.b16 %v103
    %v190 = vunpack.c.l.b16 %v104
    %v191 = vunpack.c.h.b16 %v104
    %v192 = vunpack.c.l.b16 %v105
    %v193 = vunpack.c.h.b16 %v105
    %v194 = vunpack.c.l.b16 %v106
    %v195 = vunpack.c.h.b16 %v106
    %v196 = vunpack.c.l.b16 %v107
    %v197 = vunpack.c.h.b16 %v107
    %v198 = vunpack.c.l.b16 %v108
    %v199 = vunpack.c.h.b16 %v108
    %v200 = vunpack.c.l.b16 %v109
    %v201 = vunpack.c.h.b16 %v109
    %v202 = vunpack.c.l.b16 %v110
    %v203 = vunpack.c.h.b16 %v110
    %v204 = vunpack.c.l.b16 %v111
    %v205 = vunpack.c.h.b16 %v111
    %v206 = vunpack.c.l.b16 %v112
    %v207 = vunpack.c.h.b16 %v112
    %v208 = vunpack.c.l.b16 %v113
    %v209 = vunpack.c.h.b16 %v113
    %v210 = vunpack.c.l.b16 %v114
    %v211 = vunpack.c.h.b16 %v114
    %v212 = vunpack.c.l.b16 %v115
    %v213 = vunpack.c.h.b16 %v115
    %v214 = vunpack.c.l.b16 %v116
    %v215 = vunpack.c.h.b16 %v116
    %v216 = vunpack.c.l.b16 %v117
    %v217 = vunpack.c.h.b16 %v117
    %v218 = vpack.c.b16 %v158, %v154
    %v219 = vpack.c.b16 %v159, %v155
    %v220 = vpack.c.b16 %v160, %v156
    %v221 = vpack.c.b16 %v161, %v157
    %v222 = vpack.c.b16 %v166, %v162
    %v223 = vpack.c.b16 %v167, %v163
    %v224 = vpack.c.b16 %v168, %v164
    %v225 = vpack.c.b16 %v169, %v165
    %v226 = vpack.c.b16 %v174, %v170
    %v227 = vpack.c.b16 %v175, %v171
    %v228 = vpack.c.b16 %v176, %v172
    %v229 = vpack.c.b16 %v177, %v173
    %v230 = vpack.c.b16 %v182, %v178
    %v231 = vpack.c.b16 %v183, %v179
    %v232 = vpack.c.b16 %v184, %v180
    %v233 = vpack.c.b16 %v185, %v181
    %v234 = vpack.c.b16 %v190, %v186
    %v235 = vpack.c.b16 %v191, %v187
    %v236 = vpack.c.b16 %v192, %v188
    %v237 = vpack.c.b16 %v193, %v189
    %v238 = vpack.c.b16 %v198, %v194
    %v239 = vpack.c.b16 %v199, %v195
    %v240 = vpack.c.b16 %v200, %v196
    %v241 = vpack.c.b16 %v201, %v197
    %v242 = vpack.c.b16 %v206, %v202
    %v243 = vpack.c.b16 %v207, %v203
    %v244 = vpack.c.b16 %v208, %v204
    %v245 = vpack.c.b16 %v209, %v205
    %v246 = vpack.c.b16 %v214, %v210
    %v247 = vpack.c.b16 %v215, %v211
    %v248 = vpack.c.b16 %v216, %v212
    %v249 = vpack.c.b16 %v217, %v213
    %282 = vmatprep.subr.bf16.mxu0 %v247
    %283 = vmatpush1.bf16.msra.mxu0 %v246
    %284 = vmatprep.subr.bf16.mxu0 %v243
    %285 = vmatpush1.bf16.msra.mxu0 %v242
    %286 = vmatprep.subr.bf16.mxu0 %v239
    %287 = vmatpush1.bf16.msra.mxu0 %v238
    %288 = vmatprep.subr.bf16.mxu0 %v235
    %289 = vmatpush1.bf16.msra.mxu0 %v234
    %290 = vmatprep.subr.bf16.mxu0 %v231
    %291 = vmatpush1.bf16.msra.mxu0 %v230
    %292 = vmatprep.subr.bf16.mxu0 %v227
    %293 = vmatpush1.bf16.msra.mxu0 %v226
    %294 = vmatprep.subr.bf16.mxu0 %v223
    %295 = vmatpush1.bf16.msra.mxu0 %v222
    %296 = vmatprep.subr.bf16.mxu0 %v219
    %297 = vmatpush1.bf16.msra.mxu0 %v218
    %298 = vmatprep.subr.bf16.mxu0 0
    %299 = vmatpush2.bf16.msra.mxu0 0
    %300 = vmatprep.subr.bf16.mxu0 0
    %301 = vmatpush2.bf16.msra.mxu0 0
    %302 = vmatprep.subr.bf16.mxu0 0
    %303 = vmatpush2.bf16.msra.mxu0 0
    %304 = vmatprep.subr.bf16.mxu0 0
    %305 = vmatpush2.bf16.msra.mxu0 0
    %306 = vmatprep.subr.bf16.mxu0 0
    %307 = vmatpush2.bf16.msra.mxu0 0
    %308 = vmatprep.subr.bf16.mxu0 0
    %309 = vmatpush2.bf16.msra.mxu0 0
    %310 = vmatprep.subr.bf16.mxu0 0
    %311 = vmatpush2.bf16.msra.mxu0 0
    %312 = vmatprep.subr.bf16.mxu0 0
    %313 = vmatpush2.bf16.msra.mxu0 0
    %314 = vmatprep.mubr.bf16.mxu0 0
    %315 = vmatmul.mubr.bf16.gmra.mxu0 %v120
    %v316 = vpop.f32.mrf.mxu0
    %v317 = vadd.f32 0.0, %v316
    %v318 = vpop.f32.mrf.mxu0
    %v319 = vadd.f32 0.0, %v318
    %v320 = vpop.f32.mrf.mxu0
    %v321 = vpop.f32.mrf.mxu0
    %322 = vdwg.mxu0
    %323 = vmatprep.subr.bf16.mxu0 %v249
    %324 = vmatpush1.bf16.msra.mxu0 %v248
    %325 = vmatprep.subr.bf16.mxu0 %v245
    %326 = vmatpush1.bf16.msra.mxu0 %v244
    %327 = vmatprep.subr.bf16.mxu0 %v241
    %328 = vmatpush1.bf16.msra.mxu0 %v240
    %329 = vmatprep.subr.bf16.mxu0 %v237
    %330 = vmatpush1.bf16.msra.mxu0 %v236
    %331 = vmatprep.subr.bf16.mxu0 %v233
    %332 = vmatpush1.bf16.msra.mxu0 %v232
    %333 = vmatprep.subr.bf16.mxu0 %v229
    %334 = vmatpush1.bf16.msra.mxu0 %v228
    %335 = vmatprep.subr.bf16.mxu0 %v225
    %336 = vmatpush1.bf16.msra.mxu0 %v224
    %337 = vmatprep.subr.bf16.mxu0 %v221
    %338 = vmatpush1.bf16.msra.mxu0 %v220
    %339 = vmatprep.subr.bf16.mxu0 0
    %340 = vmatpush2.bf16.msra.mxu0 0
    %341 = vmatprep.subr.bf16.mxu0 0
    %342 = vmatpush2.bf16.msra.mxu0 0
    %343 = vmatprep.subr.bf16.mxu0 0
    %344 = vmatpush2.bf16.msra.mxu0 0
    %345 = vmatprep.subr.bf16.mxu0 0
    %346 = vmatpush2.bf16.msra.mxu0 0
    %347 = vmatprep.subr.bf16.mxu0 0
    %348 = vmatpush2.bf16.msra.mxu0 0
    %349 = vmatprep.subr.bf16.mxu0 0
    %350 = vmatpush2.bf16.msra.mxu0 0
    %351 = vmatprep.subr.bf16.mxu0 0
    %352 = vmatpush2.bf16.msra.mxu0 0
    %353 = vmatprep.subr.bf16.mxu0 0
    %354 = vmatpush2.bf16.msra.mxu0 0
    %355 = vmatprep.mubr.bf16.mxu0 0
    %356 = vmatmul.mubr.bf16.gmra.mxu0 %v120
    %v357 = vpop.f32.mrf.mxu0
    %v358 = vadd.f32 0.0, %v357
    %v359 = vpop.f32.mrf.mxu0
    %v360 = vadd.f32 0.0, %v359
    %v361 = vpop.f32.mrf.mxu0
    %v362 = vpop.f32.mrf.mxu0
    %363 = vdwg.mxu0
    %v364 = vrot.slane %v317, 4
    %v365 = vadd.f32 %v317, %v364
    %v366 = vrot.slane %v365, 2
    %v367 = vadd.f32 %v365, %v366
    %v368 = vrot.slane %v367, 1
    %v369 = vadd.f32 %v367, %v368
    %v370 = vrot.slane %v319, 4
    %v371 = vadd.f32 %v319, %v370
    %v372 = vrot.slane %v371, 2
    %v373 = vadd.f32 %v371, %v372
    %v374 = vrot.slane %v373, 1
    %v375 = vadd.f32 %v373, %v374
    %v376 = vrot.slane %v358, 4
    %v377 = vadd.f32 %v358, %v376
    %v378 = vrot.slane %v377, 2
    %v379 = vadd.f32 %v377, %v378
    %v380 = vrot.slane %v379, 1
    %v381 = vadd.f32 %v379, %v380
    %v382 = vrot.slane %v360, 4
    %v383 = vadd.f32 %v360, %v382
    %v384 = vrot.slane %v383, 2
    %v385 = vadd.f32 %v383, %v384
    %v386 = vrot.slane %v385, 1
    %v387 = vadd.f32 %v385, %v386
    %v388 = vmul.f32 %v369, 0.125
    %v389 = vmul.f32 %v375, 0.125
    %v390 = vmul.f32 %v381, 0.125
    %v391 = vmul.f32 %v387, 0.125
    %v392 = vsub.f32 %v317, %v388
    %v393 = vsub.f32 %v319, %v389
    %v394 = vsub.f32 %v358, %v390
    %v395 = vsub.f32 %v360, %v391
    %v396 = vmul.f32 %v392, %v392
    %v397 = vmul.f32 %v393, %v393
    %v398 = vmul.f32 %v394, %v394
    %v399 = vmul.f32 %v395, %v395
    %v400 = vrot.slane %v396, 4
    %v401 = vadd.f32 %v396, %v400
    %v402 = vrot.slane %v401, 2
    %v403 = vadd.f32 %v401, %v402
    %v404 = vrot.slane %v403, 1
    %v405 = vadd.f32 %v403, %v404
    %v406 = vrot.slane %v397, 4
    %v407 = vadd.f32 %v397, %v406
    %v408 = vrot.slane %v407, 2
    %v409 = vadd.f32 %v407, %v408
    %v410 = vrot.slane %v409, 1
    %v411 = vadd.f32 %v409, %v410
    %v412 = vrot.slane %v398, 4
    %v413 = vadd.f32 %v398, %v412
    %v414 = vrot.slane %v413, 2
    %v415 = vadd.f32 %v413, %v414
    %v416 = vrot.slane %v415, 1
    %v417 = vadd.f32 %v415, %v416
    %v418 = vrot.slane %v399, 4
    %v419 = vadd.f32 %v399, %v418
    %v420 = vrot.slane %v419, 2
    %v421 = vadd.f32 %v419, %v420
    %v422 = vrot.slane %v421, 1
    %v423 = vadd.f32 %v421, %v422
    %v424 = vmul.f32 %v405, 0.125
    %v425 = vmul.f32 %v411, 0.125
    %v426 = vmul.f32 %v417, 0.125
    %v427 = vmul.f32 %v423, 0.125
    %v429 = vlaneseq
    %v430 = vshrl.u32 %v429, 7
    %v431 = vsub.s32 0, %v430
    %v432 = vrot.slane %v118, %v431
    %v433 = vlaneseq
    %v434 = vshrl.u32 %v433, 7
    %v435 = vsub.s32 1, %v434
    %v436 = vrot.slane %v118, %v435
    %v437 = vlaneseq
    %v438 = vshrl.u32 %v437, 7
    %v439 = vsub.s32 2, %v438
    %v440 = vrot.slane %v118, %v439
    %v441 = vlaneseq
    %v442 = vshrl.u32 %v441, 7
    %v443 = vsub.s32 3, %v442
    %v444 = vrot.slane %v118, %v443
    %v449 = vmul.f32 %v432, %v392
    %v450 = vmul.f32 %v436, %v393
    %v451 = vmul.f32 %v440, %v394
    %v452 = vmul.f32 %v444, %v395
    %v453 = vadd.f32 %v424, 1e-05
    %v454 = vadd.f32 %v425, 1e-05
    %v455 = vadd.f32 %v426, 1e-05
    %v456 = vadd.f32 %v427, 1e-05
    %v457 = vrsqrt.pop %v453
    %v458 = vrsqrt.pop %v454
    %v459 = vrsqrt.pop %v455
    %v460 = vrsqrt.pop %v456
    %v461 = vmul.f32 %v449, %v457
    %v462 = vmul.f32 %v450, %v458
    %v463 = vmul.f32 %v451, %v459
    %v464 = vmul.f32 %v452, %v460
    %v465 = vld [vmem:[#allocation4] sm:$0xff]
    %v466 = vld [vmem:[#allocation4 + $0x8] sm:$0xff]
    %v467 = vunpack.c.l.bf16 %v465
    %v468 = vunpack.c.h.bf16 %v465
    %v469 = vunpack.c.l.bf16 %v466
    %v470 = vunpack.c.h.bf16 %v466
    %v471 = vadd.f32 %v461, %v467
    %v472 = vadd.f32 %v462, %v468
    %v473 = vadd.f32 %v463, %v469
    %v474 = vadd.f32 %v464, %v470
    %v475 = vmul.f32 %v471, 0.5
    %v476 = vtanh.pop %v475
    %v477 = vadd.f32 %v476, 1.0
    %v478 = vmul.f32 %v477, 0.5
    %v479 = vmul.f32 %v478, %v121
    %v480 = vmul.f32 %v472, 0.5
    %v481 = vtanh.pop %v480
    %v482 = vadd.f32 %v481, 1.0
    %v483 = vmul.f32 %v482, 0.5
    %v484 = vtanh.pop %v474
    %v485 = vmul.f32 %v483, %v484
    %v486 = vadd.f32 %v479, %v485
    %v487 = vmul.f32 %v473, 0.5
    %v488 = vtanh.pop %v487
    %v489 = vadd.f32 %v488, 1.0
    %v490 = vmul.f32 %v489, 0.5
    %v491 = vrot.slane %v486, 4
    %v492 = vadd.f32 %v486, %v491
    %v493 = vrot.slane %v492, 2
    %v494 = vadd.f32 %v492, %v493
    %v495 = vrot.slane %v494, 1
    %v496 = vadd.f32 %v494, %v495
    %v497 = vmul.f32 %v496, 0.125
    %v498 = vsub.f32 %v486, %v497
    %v499 = vmul.f32 %v498, %v498
    %v500 = vrot.slane %v499, 4
    %v501 = vadd.f32 %v499, %v500
    %v502 = vrot.slane %v501, 2
    %v503 = vadd.f32 %v501, %v502
    %v504 = vrot.slane %v503, 1
    %v505 = vadd.f32 %v503, %v504
    %v506 = vmul.f32 %v505, 0.125
    %v508 = vlaneseq
    %v509 = vshrl.u32 %v508, 7
    %v510 = vsub.s32 0, %v509
    %v511 = vrot.slane %v119, %v510
    %v513 = vmul.f32 %v511, %v498
    %v514 = vadd.f32 %v506, 1e-05
    %v515 = vrsqrt.pop %v514
    %v516 = vmul.f32 %v513, %v515
    %v517 = vtanh.pop %v516
    %v518 = vmul.f32 %v490, %v517
    %v519 = vpack.c.bf16 %v518, %v518
    %520 = vst [vmem:[#allocation2] sm:$0xf] %v519
    %521 = vst [vmem:[#allocation3] sm:$0xff] %v486
    %522 = vst [vmem:[#allocation12] sm:$0xf] %v519
    %v523 = vpack.c.bf16 %v486, %v486
    %524 = vst [vmem:[#allocation13] sm:$0xf] %v523
    // Predicated region
    $region46: #{tpu_custom_call.1} parent=1 // pred_check
      _
    $region47: #{tpu_custom_call.1} parent=1 // pred_check_branch
      %526 = sbr.rel (0) target = $region49
    $region48: #{tpu_custom_call.1} parent=1 // pred_region
      %s528 = ssub.s32 64, 64
      %529 = vsyncadd [#allocation6], %s528
      %s531 = sshll.u32 [#allocation12], 4
      %s532 = int_to_ptr.vmem [resolvable:$true] %s531
      %534 = dma.vmem_to_hbm [thread:$0]  %s532, 64, %s6, [#allocation6]
    $region49: #{tpu_custom_call.1} parent=1 // pred_fallthru
      _
    // Predicated region
    $region50: #{tpu_custom_call.1} parent=1 // pred_check
      _
    $region51: #{tpu_custom_call.1} parent=1 // pred_check_branch
      %536 = sbr.rel (0) target = $region53
    $region52: #{tpu_custom_call.1} parent=1 // pred_region
      %s538 = ssub.s32 64, 64
      %539 = vsyncadd [#allocation14], %s538
      %s541 = sshll.u32 [#allocation13], 4
      %s542 = int_to_ptr.vmem [resolvable:$true] %s541
      %544 = dma.vmem_to_hbm [thread:$0]  %s542, 64, %s7, [#allocation14]
    $region53: #{tpu_custom_call.1} parent=1 // pred_fallthru
      _
    // Predicated region
    $region54: #{tpu_custom_call.1} parent=1 // pred_check
      _
    $region55: #{tpu_custom_call.1} parent=1 // pred_check_branch
      %546 = sbr.rel (0) target = $region57
    $region56: #{tpu_custom_call.1} parent=1 // pred_region
      %547 = dma.done [#allocation6], 64
    $region57: #{tpu_custom_call.1} parent=1 // pred_fallthru
      _
    // Predicated region
    $region58: #{tpu_custom_call.1} parent=1 // pred_check
      _
    $region59: #{tpu_custom_call.1} parent=1 // pred_check_branch
      %549 = sbr.rel (0) target = $region61
    $region60: #{tpu_custom_call.1} parent=1 // pred_region
      %550 = dma.done [#allocation14], 64
    $region61: #{tpu_custom_call.1} parent=1 // pred_fallthru
      _
    %551 = vsyncpa [#allocation5], 1
    %552 = vsyncpa [#allocation8], 1
    %553 = vsyncpa [#allocation11], 1
    %554 = vsyncpa [#allocation6], 1
    %555 = vsyncpa [#allocation14], 1

</llo_original>
